<compile_context>
chip_gen: v6e
topology: v6e:2x2x1
jax: 0.10.0
libtpu: 0.0.40
codegen_flags: <defaults>
</compile_context>

<pallas_src>
import functools

import jax
import jax.numpy as jnp
import numpy as np
from jax.experimental import pallas as pl
from jax.experimental.pallas import tpu as pltpu


def _round_up(x, m):
    return (x + m - 1) // m * m


# ----------------------------------------------------------------------------- #
# Pallas kernel: fused trunk MLP + hadamard with cached branch + output proj.
# Layout: activations are (H, TN*TM) -- pair-rows on lanes, H on sublanes.
# ----------------------------------------------------------------------------- #
def _nff_kernel(layer_num, compute_dtype,
                pre_ref,      # (1, 1, 2H, TN)  per-n [trunk-n-half ; branch-out], transposed
                q_ref,        # (1, 8, TM)      query features (padded to 8), transposed
                qw_ref,       # (H, 8)          trunk first-layer weight^T (padded)
                tws_ref,      # (L, H, H)       trunk hidden weights, transposed
                tbs_ref,      # (L, H, 1)       trunk hidden biases, transposed
                ow_ref,       # (3, H)          output weight^T
                ob_ref,       # (3, 1)          output bias
                out_ref,      # (1, TN, 3, TM)
                tnb_sc,       # (H, TN*TM)  broadcast n-half of trunk layer 0
                brb_sc):      # (H, TN*TM)  broadcast branch output
    H = qw_ref.shape[0]
    TN = pre_ref.shape[3]
    TM = q_ref.shape[2]
    R = TN * TM

    # ---- once per (b, n-tile, m-chunk): expand per-n columns over the M axis -- #
    # both[:, n*TM + m] = pre[:, n]  via a one-hot MXU matmul (no transposes /
    # lane gathers needed; fully amortized over the inner M loop).
    @pl.when(pl.program_id(3) == 0)
    def _():
        pre = pre_ref[0, 0]                                              # (2H, TN)
        r_idx = jax.lax.broadcasted_iota(jnp.int32, (TN, R), 0)
        c_idx = jax.lax.broadcasted_iota(jnp.int32, (TN, R), 1)
        d = c_idx - r_idx * TM
        sel = jnp.where((d >= 0) & (d < TM), 1.0, 0.0).astype(jnp.float32)
        both = jnp.dot(pre, sel, preferred_element_type=jnp.float32)     # (2H, R)
        tnb_sc[...] = both[:H, :]
        brb_sc[...] = both[H:, :]

    # ---- every step: m-half of the trunk first layer ------------------------- #
    q = q_ref[0]                                                         # (8, TM)
    t_m = jnp.dot(qw_ref[...], q, preferred_element_type=jnp.float32)    # (H, TM)

    # Full first-layer pre-activation for all TN*TM pairs (lane-dense).
    t = tnb_sc[...] + jnp.concatenate([t_m] * TN, axis=1)                # (H, R)

    # trunk hidden layers on the MXU (optionally bf16 operands, f32 accumulate)
    for l in range(layer_num):
        t = jnp.maximum(t, 0.0)
        t = jnp.dot(tws_ref[l], t.astype(compute_dtype),
                    preferred_element_type=jnp.float32) + tbs_ref[l]

    # hadamard with the cached branch output, then project to the 3-vector force
    fused = t * brb_sc[...]
    out = jnp.dot(ow_ref[...], fused.astype(compute_dtype),
                  preferred_element_type=jnp.float32) + ob_ref[...]      # (3, R)

    # lane-dense stores: one (3, TM) slab per init object n
    for n in range(TN):
        out_ref[0, n] = out[:, n * TM:(n + 1) * TM]


# ----------------------------------------------------------------------------- #
# Wrapper
# ----------------------------------------------------------------------------- #
def force_field_pallas(init, query, params, *, layer_num, hidden_dim,
                       tile_n=32, tile_m=512, m_parallel=1,
                       compute_dtype=jnp.float32):
    """Pallas implementation of ForceFieldPredictor.forward.

    init:  (B, N, F>=4) float32
    query: (B, M, F>=4) float32
    returns force: (B, N, M, 3) float32
    """
    B, N, _ = init.shape
    M = query.shape[1]
    H = hidden_dim
    (tw0, tb0, tws, tbs, bw0, bb0, bws, bbs, ow, ob) = params

    init4 = init[..., :4].astype(jnp.float32)     # (B, N, 4)
    q4 = query[..., :4].astype(jnp.float32)       # (B, M, 4)

    # --- tiny O(B*N) dedup precompute (XLA): branch MLP + n-half of trunk l0 --- #
    br = init4[..., 0:1] @ bw0 + bb0                                   # (B, N, H)
    for l in range(layer_num):
        br = jnp.maximum(br, 0.0) @ bws[l] + bbs[l]
    tn = tb0 - init4[..., 1:4] @ tw0[1:4, :]                           # (B, N, H)
    pre = jnp.concatenate([tn, br], axis=-1)                           # (B, N, 2H)

    # --- tiling ---------------------------------------------------------------- #
    TN = _round_up(min(tile_n, _round_up(N, 8)), 8)
    TM = _round_up(min(tile_m, _round_up(M, 128)), 128)
    MC = max(1, int(m_parallel))
    N_pad = _round_up(N, TN)
    M_pad = _round_up(M, TM * MC)
    NT = N_pad // TN
    MI = M_pad // (TM * MC)
    R = TN * TM

    # per-n quantities, transposed so the kernel gets clean (2H, TN) tiles
    pre = jnp.pad(pre, ((0, 0), (0, N_pad - N), (0, 0)))
    pre_t = jnp.transpose(pre.reshape(B, NT, TN, 2 * H), (0, 1, 3, 2))  # (B,NT,2H,TN)

    # query, transposed & feature-padded to 8 rows for a clean K=8 dot
    q_t = jnp.transpose(jnp.pad(q4, ((0, 0), (0, M_pad - M), (0, 0))), (0, 2, 1))
    q_t = jnp.pad(q_t, ((0, 0), (0, 4), (0, 0)))                        # (B, 8, M_pad)

    # weights, transposed for the (H, rows) dataflow
    qw = jnp.pad(tw0.T, ((0, 0), (0, 4))).astype(jnp.float32)           # (H, 8)
    L_eff = max(layer_num, 1)
    if layer_num > 0:
        twsT = jnp.swapaxes(tws, 1, 2).astype(compute_dtype)            # (L, H, H)
        tbsT = tbs[:, :, None].astype(jnp.float32)                      # (L, H, 1)
    else:
        twsT = jnp.zeros((1, H, H), compute_dtype)
        tbsT = jnp.zeros((1, H, 1), jnp.float32)
    owT = ow.T.astype(compute_dtype)                                    # (3, H)
    obT = ob.reshape(3, 1).astype(jnp.float32)                          # (3, 1)

    grid = (B, NT, MC, MI)

    def full_spec(shape):
        zeros = (0,) * len(shape)
        return pl.BlockSpec(shape, lambda *_: zeros)

    # VMEM budget derived from the actual buffers (headroom for v7x's 64 MiB)
    w_bytes = jnp.dtype(compute_dtype).itemsize
    est = (2 * H * R * 4                       # persistent broadcast scratches
           + 5 * H * R * 4                     # transient (H, R) activation copies
           + 3 * TN * R * 4                    # one-hot expander transients
           + 4 * TN * 3 * TM * 4               # double-buffered output block
           + 2 * (8 * TM + 2 * H * TN) * 4     # double-buffered input blocks
           + 2 * (L_eff * H * H * w_bytes + L_eff * H * 4
                  + 8 * H * 4 + 3 * H * w_bytes + 16))
    vmem_limit = int(min(max(est + (8 << 20), 32 << 20), 56 << 20))

    out = pl.pallas_call(
        functools.partial(_nff_kernel, layer_num, compute_dtype),
        out_shape=jax.ShapeDtypeStruct((B, N_pad, 3, M_pad), jnp.float32),
        grid_spec=pltpu.PrefetchScalarGridSpec(
            num_scalar_prefetch=0,
            grid=grid,
            in_specs=[
                pl.BlockSpec((1, 1, 2 * H, TN),
                             lambda b, nt, mc, mi: (b, nt, 0, 0)),
                pl.BlockSpec((1, 8, TM),
                             lambda b, nt, mc, mi: (b, 0, mc * MI + mi)),
                full_spec((H, 8)),
                full_spec((L_eff, H, H)),
                full_spec((L_eff, H, 1)),
                full_spec((3, H)),
                full_spec((3, 1)),
            ],
            out_specs=pl.BlockSpec((1, TN, 3, TM),
                                   lambda b, nt, mc, mi: (b, nt, 0, mc * MI + mi)),
            scratch_shapes=[
                pltpu.VMEM((H, R), jnp.float32),   # broadcast n-half of trunk l0
                pltpu.VMEM((H, R), jnp.float32),   # broadcast branch output
            ],
        ),
        compiler_params=pltpu.CompilerParams(
            dimension_semantics=("parallel", "parallel", "parallel", "arbitrary"),
            vmem_limit_bytes=vmem_limit,
        ),
    )(pre_t, q_t, qw, twsT, tbsT, owT, obT)

    # (B, N_pad, 3, M_pad) -> (B, N, M, 3)
    return jnp.transpose(out[:, :N, :, :M], (0, 1, 3, 2))


# ----------------------------------------------------------------------------- #
# Deterministic parameter init (mimics nn.Linear shapes; synthetic values)
# ----------------------------------------------------------------------------- #
def init_params(key, layer_num, hidden_dim):
    H = hidden_dim
    ks = jax.random.split(key, 10)

    def lin(k, fan_in, fan_out):
        bound = 1.0 / np.sqrt(fan_in)
        kw, kb = jax.random.split(k)
        w = jax.random.uniform(kw, (fan_in, fan_out), jnp.float32, -bound, bound)
        b = jax.random.uniform(kb, (1, fan_out), jnp.float32, -bound, bound)
        return w, b

    tw0, tb0 = lin(ks[0], 4, H)
    bw0, bb0 = lin(ks[1], 1, H)

    tws, tbs, bws, bbs = [], [], [], []
    for l in range(layer_num):
        w, b = lin(jax.random.fold_in(ks[2], l), H, H)
        tws.append(w); tbs.append(b[0])
        w, b = lin(jax.random.fold_in(ks[3], l), H, H)
        bws.append(w); bbs.append(b[0])
    tws = jnp.stack(tws) if layer_num else jnp.zeros((0, H, H), jnp.float32)
    tbs = jnp.stack(tbs) if layer_num else jnp.zeros((0, H), jnp.float32)
    bws = jnp.stack(bws) if layer_num else jnp.zeros((0, H, H), jnp.float32)
    bbs = jnp.stack(bbs) if layer_num else jnp.zeros((0, H), jnp.float32)

    ow, ob = lin(ks[4], H, 3)
    return (tw0, tb0, tws, tbs, bw0, bb0, bws, bbs, ow, ob)


# ----------------------------------------------------------------------------- #
# Pure-JAX reference (mirrors the PyTorch forward exactly)
# ----------------------------------------------------------------------------- #
def reference_forward(init, query, params, layer_num):
    (tw0, tb0, tws, tbs, bw0, bb0, bws, bbs, ow, ob) = params
    B, N, _ = init.shape
    M = query.shape[1]
    init4 = init[..., :4]
    query4 = query[..., :4]
    init_exp = jnp.broadcast_to(init4[:, :, None, :], (B, N, M, 4))
    query_exp = jnp.broadcast_to(query4[:, None, :, :], (B, N, M, 4))
    rel = query_exp[..., 1:4] - init_exp[..., 1:4]

    def mlp(x, w0, b0, ws, bs):
        h = x @ w0 + b0
        for l in range(layer_num):
            h = jnp.maximum(h, 0.0)
            h = h @ ws[l] + bs[l]
        return h

    branch = mlp(init_exp[..., :1], bw0, bb0, bws, bbs)
    trunk = mlp(jnp.concatenate([query_exp[..., :1], rel], -1), tw0, tb0, tws, tbs)
    return (trunk * branch) @ ow + ob


# ----------------------------------------------------------------------------- #
if __name__ == "__main__":
    layer_num = 2
    feature_dim = 4   # forward only ever uses the first 4 features
    hidden_dim = 32

    key = jax.random.PRNGKey(0)
    k_init, k_query, k_params, k2i, k2q = jax.random.split(key, 5)
    params = init_params(k_params, layer_num, hidden_dim)

    # Case 1: small shapes, default tiles (single grid step).
    B, N, M = 2, 8, 8
    init = jax.random.normal(k_init, (B, N, feature_dim), jnp.float32)
    query = jax.random.normal(k_query, (B, M, feature_dim), jnp.float32)
    force = jax.block_until_ready(
        force_field_pallas(init, query, params,
                           layer_num=layer_num, hidden_dim=hidden_dim))
    ref = reference_forward(init, query, params, layer_num)
    np.testing.assert_allclose(np.asarray(force), np.asarray(ref),
                               rtol=1e-4, atol=1e-4)
    assert force.shape == (B, N, M, 3)

    # Case 2: non-tile-multiple shapes -> exercises padding, a multi-tile grid
    # (2,3,1,3) and scratch reuse across the inner M axis.
    B2, N2, M2 = 2, 20, 300
    init2 = jax.random.normal(k2i, (B2, N2, feature_dim), jnp.float32)
    query2 = jax.random.normal(k2q, (B2, M2, feature_dim), jnp.float32)
    force2 = jax.block_until_ready(
        force_field_pallas(init2, query2, params,
                           layer_num=layer_num, hidden_dim=hidden_dim,
                           tile_n=8, tile_m=128))
    ref2 = reference_forward(init2, query2, params, layer_num)
    np.testing.assert_allclose(np.asarray(force2), np.asarray(ref2),
                               rtol=1e-4, atol=1e-4)
    assert force2.shape == (B2, N2, M2, 3)

    # Case 3: bf16 matmul operands (f32 accumulate) + M split into 2 "parallel"
    # chunks (covers v7x's second TensorCore when B*N_tiles is small).
    force3 = jax.block_until_ready(
        force_field_pallas(init2, query2, params,
                           layer_num=layer_num, hidden_dim=hidden_dim,
                           tile_n=16, tile_m=128, m_parallel=2,
                           compute_dtype=jnp.bfloat16))
    np.testing.assert_allclose(np.asarray(force3), np.asarray(ref2),
                               rtol=1e-1, atol=1e-1)   # loose: bf16 operands

    print("KERNEL_OK")
</pallas_src>

<mosaic_0001>
module attributes {stable_mosaic.version = 11 : i64} {
  func.func @_nff_kernel(%arg0: i32, %arg1: i32, %arg2: i32, %arg3: i32, %arg4: memref<1x1x64x8xf32, #tpu.memory_space<vmem>>, %arg5: memref<1x8x128xf32, #tpu.memory_space<vmem>>, %arg6: memref<32x8xf32, #tpu.memory_space<vmem>>, %arg7: memref<2x32x32xf32, #tpu.memory_space<vmem>>, %arg8: memref<2x32x1xf32, #tpu.memory_space<vmem>>, %arg9: memref<3x32xf32, #tpu.memory_space<vmem>>, %arg10: memref<3x1xf32, #tpu.memory_space<vmem>>, %arg11: memref<1x8x3x128xf32, #tpu.memory_space<vmem>>, %arg12: memref<32x1024xf32, #tpu.memory_space<vmem>>, %arg13: memref<32x1024xf32, #tpu.memory_space<vmem>>) attributes {dimension_semantics = [#tpu.dimension_semantics<parallel>, #tpu.dimension_semantics<parallel>, #tpu.dimension_semantics<parallel>, #tpu.dimension_semantics<arbitrary>], iteration_bounds = array<i64: 2, 1, 1, 1>, scalar_prefetch = 0 : i64, scratch_operands = 2 : i64, tpu.core_type = #tpu.core_type<tc>, window_params = [{transform_indices = @transform_0, window_bounds = array<i64: 1, 1, 64, 8>}, {transform_indices = @transform_1, window_bounds = array<i64: 1, 8, 128>}, {pipeline_mode = #tpu.pipeline_mode<synchronous>, transform_indices = @transform_2, window_bounds = array<i64: 32, 8>}, {pipeline_mode = #tpu.pipeline_mode<synchronous>, transform_indices = @transform_3, window_bounds = array<i64: 2, 32, 32>}, {pipeline_mode = #tpu.pipeline_mode<synchronous>, transform_indices = @transform_4, window_bounds = array<i64: 2, 32, 1>}, {pipeline_mode = #tpu.pipeline_mode<synchronous>, transform_indices = @transform_5, window_bounds = array<i64: 3, 32>}, {pipeline_mode = #tpu.pipeline_mode<synchronous>, transform_indices = @transform_6, window_bounds = array<i64: 3, 1>}, {transform_indices = @transform_7, window_bounds = array<i64: 1, 8, 3, 128>}]} {
    %c0_i32 = arith.constant 0 : i32
    %0 = arith.cmpi eq, %arg3, %c0_i32 : i32
    %1 = arith.extui %0 : i1 to i32
    %c0_i32_0 = arith.constant 0 : i32
    %2 = arith.cmpi ne, %1, %c0_i32_0 : i32
    scf.if %2 {
      %c0_55 = arith.constant 0 : index
      %c0_56 = arith.constant 0 : index
      %c0_57 = arith.constant 0 : index
      %c0_58 = arith.constant 0 : index
      %67 = vector.load %arg4[%c0_55, %c0_56, %c0_57, %c0_58] : memref<1x1x64x8xf32, #tpu.memory_space<vmem>>, vector<1x1x64x8xf32>
      %68 = vector.shape_cast %67 : vector<1x1x64x8xf32> to vector<64x8xf32>
      %69 = tpu.iota {dimensions = array<i32: 0>} : vector<8x1024xi32>
      %70 = tpu.iota {dimensions = array<i32: 1>} : vector<8x1024xi32>
      %c128_i32 = arith.constant 128 : i32
      %71 = vector.broadcast %c128_i32 : i32 to vector<8x1024xi32>
      %72 = arith.muli %69, %71 : vector<8x1024xi32>
      %73 = arith.subi %70, %72 : vector<8x1024xi32>
      %c0_i32_59 = arith.constant 0 : i32
      %74 = vector.broadcast %c0_i32_59 : i32 to vector<8x1024xi32>
      %75 = arith.cmpi sge, %73, %74 : vector<8x1024xi32>
      %c128_i32_60 = arith.constant 128 : i32
      %76 = vector.broadcast %c128_i32_60 : i32 to vector<8x1024xi32>
      %77 = arith.cmpi slt, %73, %76 : vector<8x1024xi32>
      %78 = arith.andi %75, %77 : vector<8x1024xi1>
      %cst_61 = arith.constant 1.000000e+00 : f32
      %cst_62 = arith.constant 0.000000e+00 : f32
      %79 = vector.broadcast %cst_61 : f32 to vector<8x1024xf32>
      %80 = vector.broadcast %cst_62 : f32 to vector<8x1024xf32>
      %81 = arith.select %78, %79, %80 : vector<8x1024xi1>, vector<8x1024xf32>
      %cst_63 = arith.constant dense<0.000000e+00> : vector<64x1024xf32>
      %82 = tpu.matmul %68, %81, %cst_63 {dimension_numbers = #tpu.dot_dimension_numbers<[1], [0], [0], [1], [0, 0, 1, 1], [], []>} : vector<64x8xf32>, vector<8x1024xf32>, vector<64x1024xf32> -> vector<64x1024xf32>
      %83 = vector.extract_strided_slice %82 {offsets = [0, 0], sizes = [32, 1024], strides = [1, 1]} : vector<64x1024xf32> to vector<32x1024xf32>
      %c0_64 = arith.constant 0 : index
      %c0_65 = arith.constant 0 : index
      %84 = vector.load %arg12[%c0_64, %c0_65] : memref<32x1024xf32, #tpu.memory_space<vmem>>, vector<32x1024xf32>
      tpu.vector_store %arg12[%c0_64, %c0_65], %83 {strides = array<i32>} : memref<32x1024xf32, #tpu.memory_space<vmem>>, vector<32x1024xf32>,
      %85 = vector.extract_strided_slice %82 {offsets = [32, 0], sizes = [32, 1024], strides = [1, 1]} : vector<64x1024xf32> to vector<32x1024xf32>
      %c0_66 = arith.constant 0 : index
      %c0_67 = arith.constant 0 : index
      %86 = vector.load %arg13[%c0_66, %c0_67] : memref<32x1024xf32, #tpu.memory_space<vmem>>, vector<32x1024xf32>
      tpu.vector_store %arg13[%c0_66, %c0_67], %85 {strides = array<i32>} : memref<32x1024xf32, #tpu.memory_space<vmem>>, vector<32x1024xf32>,
    } else {
    }
    %c0 = arith.constant 0 : index
    %c0_1 = arith.constant 0 : index
    %c0_2 = arith.constant 0 : index
    %3 = vector.load %arg5[%c0, %c0_1, %c0_2] : memref<1x8x128xf32, #tpu.memory_space<vmem>>, vector<1x8x128xf32>
    %4 = vector.shape_cast %3 : vector<1x8x128xf32> to vector<8x128xf32>
    %c0_3 = arith.constant 0 : index
    %c0_4 = arith.constant 0 : index
    %5 = vector.load %arg6[%c0_3, %c0_4] : memref<32x8xf32, #tpu.memory_space<vmem>>, vector<32x8xf32>
    %cst = arith.constant dense<0.000000e+00> : vector<32x128xf32>
    %6 = tpu.matmul %5, %4, %cst {dimension_numbers = #tpu.dot_dimension_numbers<[1], [0], [0], [1], [0, 0, 1, 1], [], []>} : vector<32x8xf32>, vector<8x128xf32>, vector<32x128xf32> -> vector<32x128xf32>
    %c0_5 = arith.constant 0 : index
    %c0_6 = arith.constant 0 : index
    %7 = vector.load %arg12[%c0_5, %c0_6] : memref<32x1024xf32, #tpu.memory_space<vmem>>, vector<32x1024xf32>
    %8 = tpu.concatenate %6, %6, %6, %6, %6, %6, %6, %6 in 1 : vector<32x128xf32>, vector<32x128xf32>, vector<32x128xf32>, vector<32x128xf32>, vector<32x128xf32>, vector<32x128xf32>, vector<32x128xf32>, vector<32x128xf32> -> vector<32x1024xf32>
    %9 = arith.addf %7, %8 : vector<32x1024xf32>
    %cst_7 = arith.constant 0.000000e+00 : f32
    %10 = vector.broadcast %cst_7 : f32 to vector<32x1024xf32>
    %11 = arith.maximumf %9, %10 : vector<32x1024xf32>
    %c0_8 = arith.constant 0 : index
    %c0_9 = arith.constant 0 : index
    %c0_10 = arith.constant 0 : index
    %12 = vector.load %arg7[%c0_8, %c0_9, %c0_10] : memref<2x32x32xf32, #tpu.memory_space<vmem>>, vector<1x32x32xf32>
    %13 = vector.shape_cast %12 : vector<1x32x32xf32> to vector<32x32xf32>
    %cst_11 = arith.constant dense<0.000000e+00> : vector<32x1024xf32>
    %14 = tpu.matmul %13, %11, %cst_11 {dimension_numbers = #tpu.dot_dimension_numbers<[1], [0], [0], [1], [0, 0, 1, 1], [], []>} : vector<32x32xf32>, vector<32x1024xf32>, vector<32x1024xf32> -> vector<32x1024xf32>
    %c0_12 = arith.constant 0 : index
    %c0_13 = arith.constant 0 : index
    %c0_14 = arith.constant 0 : index
    %15 = vector.load %arg8[%c0_12, %c0_13, %c0_14] : memref<2x32x1xf32, #tpu.memory_space<vmem>>, vector<1x32x1xf32>
    %16 = vector.shape_cast %15 : vector<1x32x1xf32> to vector<32x1xf32>
    %17 = vector.broadcast %16 : vector<32x1xf32> to vector<32x1024xf32>
    %18 = arith.addf %14, %17 : vector<32x1024xf32>
    %cst_15 = arith.constant 0.000000e+00 : f32
    %19 = vector.broadcast %cst_15 : f32 to vector<32x1024xf32>
    %20 = arith.maximumf %18, %19 : vector<32x1024xf32>
    %c1 = arith.constant 1 : index
    %c0_16 = arith.constant 0 : index
    %c0_17 = arith.constant 0 : index
    %21 = vector.load %arg7[%c1, %c0_16, %c0_17] : memref<2x32x32xf32, #tpu.memory_space<vmem>>, vector<1x32x32xf32>
    %22 = vector.shape_cast %21 : vector<1x32x32xf32> to vector<32x32xf32>
    %cst_18 = arith.constant dense<0.000000e+00> : vector<32x1024xf32>
    %23 = tpu.matmul %22, %20, %cst_18 {dimension_numbers = #tpu.dot_dimension_numbers<[1], [0], [0], [1], [0, 0, 1, 1], [], []>} : vector<32x32xf32>, vector<32x1024xf32>, vector<32x1024xf32> -> vector<32x1024xf32>
    %c1_19 = arith.constant 1 : index
    %c0_20 = arith.constant 0 : index
    %c0_21 = arith.constant 0 : index
    %24 = vector.load %arg8[%c1_19, %c0_20, %c0_21] : memref<2x32x1xf32, #tpu.memory_space<vmem>>, vector<1x32x1xf32>
    %25 = vector.shape_cast %24 : vector<1x32x1xf32> to vector<32x1xf32>
    %26 = vector.broadcast %25 : vector<32x1xf32> to vector<32x1024xf32>
    %27 = arith.addf %23, %26 : vector<32x1024xf32>
    %c0_22 = arith.constant 0 : index
    %c0_23 = arith.constant 0 : index
    %28 = vector.load %arg13[%c0_22, %c0_23] : memref<32x1024xf32, #tpu.memory_space<vmem>>, vector<32x1024xf32>
    %29 = arith.mulf %27, %28 : vector<32x1024xf32>
    %c0_24 = arith.constant 0 : index
    %c0_25 = arith.constant 0 : index
    %30 = vector.load %arg9[%c0_24, %c0_25] : memref<3x32xf32, #tpu.memory_space<vmem>>, vector<3x32xf32>
    %cst_26 = arith.constant dense<0.000000e+00> : vector<3x1024xf32>
    %31 = tpu.matmul %30, %29, %cst_26 {dimension_numbers = #tpu.dot_dimension_numbers<[1], [0], [0], [1], [0, 0, 1, 1], [], []>} : vector<3x32xf32>, vector<32x1024xf32>, vector<3x1024xf32> -> vector<3x1024xf32>
    %c0_27 = arith.constant 0 : index
    %c0_28 = arith.constant 0 : index
    %32 = vector.load %arg10[%c0_27, %c0_28] : memref<3x1xf32, #tpu.memory_space<vmem>>, vector<3x1xf32>
    %33 = vector.broadcast %32 : vector<3x1xf32> to vector<3x1024xf32>
    %34 = arith.addf %31, %33 : vector<3x1024xf32>
    %35 = vector.extract_strided_slice %34 {offsets = [0, 0], sizes = [3, 128], strides = [1, 1]} : vector<3x1024xf32> to vector<3x128xf32>
    %c0_29 = arith.constant 0 : index
    %c0_30 = arith.constant 0 : index
    %c0_31 = arith.constant 0 : index
    %c0_32 = arith.constant 0 : index
    %36 = vector.load %arg11[%c0_29, %c0_30, %c0_31, %c0_32] : memref<1x8x3x128xf32, #tpu.memory_space<vmem>>, vector<1x1x3x128xf32>
    %37 = vector.shape_cast %36 : vector<1x1x3x128xf32> to vector<3x128xf32>
    %38 = vector.shape_cast %35 : vector<3x128xf32> to vector<1x1x3x128xf32>
    tpu.vector_store %arg11[%c0_29, %c0_30, %c0_31, %c0_32], %38 {strides = array<i32>} : memref<1x8x3x128xf32, #tpu.memory_space<vmem>>, vector<1x1x3x128xf32>,
    %39 = vector.extract_strided_slice %34 {offsets = [0, 128], sizes = [3, 128], strides = [1, 1]} : vector<3x1024xf32> to vector<3x128xf32>
    %c0_33 = arith.constant 0 : index
    %c1_34 = arith.constant 1 : index
    %c0_35 = arith.constant 0 : index
    %c0_36 = arith.constant 0 : index
    %40 = vector.load %arg11[%c0_33, %c1_34, %c0_35, %c0_36] : memref<1x8x3x128xf32, #tpu.memory_space<vmem>>, vector<1x1x3x128xf32>
    %41 = vector.shape_cast %40 : vector<1x1x3x128xf32> to vector<3x128xf32>
    %42 = vector.shape_cast %39 : vector<3x128xf32> to vector<1x1x3x128xf32>
    tpu.vector_store %arg11[%c0_33, %c1_34, %c0_35, %c0_36], %42 {strides = array<i32>} : memref<1x8x3x128xf32, #tpu.memory_space<vmem>>, vector<1x1x3x128xf32>,
    %43 = vector.extract_strided_slice %34 {offsets = [0, 256], sizes = [3, 128], strides = [1, 1]} : vector<3x1024xf32> to vector<3x128xf32>
    %c0_37 = arith.constant 0 : index
    %c2 = arith.constant 2 : index
    %c0_38 = arith.constant 0 : index
    %c0_39 = arith.constant 0 : index
    %44 = vector.load %arg11[%c0_37, %c2, %c0_38, %c0_39] : memref<1x8x3x128xf32, #tpu.memory_space<vmem>>, vector<1x1x3x128xf32>
    %45 = vector.shape_cast %44 : vector<1x1x3x128xf32> to vector<3x128xf32>
    %46 = vector.shape_cast %43 : vector<3x128xf32> to vector<1x1x3x128xf32>
    tpu.vector_store %arg11[%c0_37, %c2, %c0_38, %c0_39], %46 {strides = array<i32>} : memref<1x8x3x128xf32, #tpu.memory_space<vmem>>, vector<1x1x3x128xf32>,
    %47 = vector.extract_strided_slice %34 {offsets = [0, 384], sizes = [3, 128], strides = [1, 1]} : vector<3x1024xf32> to vector<3x128xf32>
    %c0_40 = arith.constant 0 : index
    %c3 = arith.constant 3 : index
    %c0_41 = arith.constant 0 : index
    %c0_42 = arith.constant 0 : index
    %48 = vector.load %arg11[%c0_40, %c3, %c0_41, %c0_42] : memref<1x8x3x128xf32, #tpu.memory_space<vmem>>, vector<1x1x3x128xf32>
    %49 = vector.shape_cast %48 : vector<1x1x3x128xf32> to vector<3x128xf32>
    %50 = vector.shape_cast %47 : vector<3x128xf32> to vector<1x1x3x128xf32>
    tpu.vector_store %arg11[%c0_40, %c3, %c0_41, %c0_42], %50 {strides = array<i32>} : memref<1x8x3x128xf32, #tpu.memory_space<vmem>>, vector<1x1x3x128xf32>,
    %51 = vector.extract_strided_slice %34 {offsets = [0, 512], sizes = [3, 128], strides = [1, 1]} : vector<3x1024xf32> to vector<3x128xf32>
    %c0_43 = arith.constant 0 : index
    %c4 = arith.constant 4 : index
    %c0_44 = arith.constant 0 : index
    %c0_45 = arith.constant 0 : index
    %52 = vector.load %arg11[%c0_43, %c4, %c0_44, %c0_45] : memref<1x8x3x128xf32, #tpu.memory_space<vmem>>, vector<1x1x3x128xf32>
    %53 = vector.shape_cast %52 : vector<1x1x3x128xf32> to vector<3x128xf32>
    %54 = vector.shape_cast %51 : vector<3x128xf32> to vector<1x1x3x128xf32>
    tpu.vector_store %arg11[%c0_43, %c4, %c0_44, %c0_45], %54 {strides = array<i32>} : memref<1x8x3x128xf32, #tpu.memory_space<vmem>>, vector<1x1x3x128xf32>,
    %55 = vector.extract_strided_slice %34 {offsets = [0, 640], sizes = [3, 128], strides = [1, 1]} : vector<3x1024xf32> to vector<3x128xf32>
    %c0_46 = arith.constant 0 : index
    %c5 = arith.constant 5 : index
    %c0_47 = arith.constant 0 : index
    %c0_48 = arith.constant 0 : index
    %56 = vector.load %arg11[%c0_46, %c5, %c0_47, %c0_48] : memref<1x8x3x128xf32, #tpu.memory_space<vmem>>, vector<1x1x3x128xf32>
    %57 = vector.shape_cast %56 : vector<1x1x3x128xf32> to vector<3x128xf32>
    %58 = vector.shape_cast %55 : vector<3x128xf32> to vector<1x1x3x128xf32>
    tpu.vector_store %arg11[%c0_46, %c5, %c0_47, %c0_48], %58 {strides = array<i32>} : memref<1x8x3x128xf32, #tpu.memory_space<vmem>>, vector<1x1x3x128xf32>,
    %59 = vector.extract_strided_slice %34 {offsets = [0, 768], sizes = [3, 128], strides = [1, 1]} : vector<3x1024xf32> to vector<3x128xf32>
    %c0_49 = arith.constant 0 : index
    %c6 = arith.constant 6 : index
    %c0_50 = arith.constant 0 : index
    %c0_51 = arith.constant 0 : index
    %60 = vector.load %arg11[%c0_49, %c6, %c0_50, %c0_51] : memref<1x8x3x128xf32, #tpu.memory_space<vmem>>, vector<1x1x3x128xf32>
    %61 = vector.shape_cast %60 : vector<1x1x3x128xf32> to vector<3x128xf32>
    %62 = vector.shape_cast %59 : vector<3x128xf32> to vector<1x1x3x128xf32>
    tpu.vector_store %arg11[%c0_49, %c6, %c0_50, %c0_51], %62 {strides = array<i32>} : memref<1x8x3x128xf32, #tpu.memory_space<vmem>>, vector<1x1x3x128xf32>,
    %63 = vector.extract_strided_slice %34 {offsets = [0, 896], sizes = [3, 128], strides = [1, 1]} : vector<3x1024xf32> to vector<3x128xf32>
    %c0_52 = arith.constant 0 : index
    %c7 = arith.constant 7 : index
    %c0_53 = arith.constant 0 : index
    %c0_54 = arith.constant 0 : index
    %64 = vector.load %arg11[%c0_52, %c7, %c0_53, %c0_54] : memref<1x8x3x128xf32, #tpu.memory_space<vmem>>, vector<1x1x3x128xf32>
    %65 = vector.shape_cast %64 : vector<1x1x3x128xf32> to vector<3x128xf32>
    %66 = vector.shape_cast %63 : vector<3x128xf32> to vector<1x1x3x128xf32>
    tpu.vector_store %arg11[%c0_52, %c7, %c0_53, %c0_54], %66 {strides = array<i32>} : memref<1x8x3x128xf32, #tpu.memory_space<vmem>>, vector<1x1x3x128xf32>,
    return
  }
  func.func @transform_0(%arg0: i32, %arg1: i32, %arg2: i32, %arg3: i32) -> (i32, i32, i32, i32) {
    %c0_i32 = arith.constant 0 : i32
    %c0_i32_0 = arith.constant 0 : i32
    %c0_i32_1 = arith.constant 0 : i32
    return %arg0, %arg1, %c0_i32, %c0_i32_0 : i32, i32, i32, i32
  }
  func.func @transform_1(%arg0: i32, %arg1: i32, %arg2: i32, %arg3: i32) -> (i32, i32, i32) {
    %c1_i32 = arith.constant 1 : i32
    %0 = arith.muli %arg2, %c1_i32 : i32
    %1 = arith.addi %0, %arg3 : i32
    %c0_i32 = arith.constant 0 : i32
    %c0_i32_0 = arith.constant 0 : i32
    return %arg0, %c0_i32, %1 : i32, i32, i32
  }
  func.func @transform_2(%arg0: i32, %arg1: i32, %arg2: i32, %arg3: i32) -> (i32, i32) {
    %c0_i32 = arith.constant 0 : i32
    %c0_i32_0 = arith.constant 0 : i32
    %c0_i32_1 = arith.constant 0 : i32
    return %c0_i32, %c0_i32_0 : i32, i32
  }
  func.func @transform_3(%arg0: i32, %arg1: i32, %arg2: i32, %arg3: i32) -> (i32, i32, i32) {
    %c0_i32 = arith.constant 0 : i32
    %c0_i32_0 = arith.constant 0 : i32
    %c0_i32_1 = arith.constant 0 : i32
    %c0_i32_2 = arith.constant 0 : i32
    return %c0_i32, %c0_i32_0, %c0_i32_1 : i32, i32, i32
  }
  func.func @transform_4(%arg0: i32, %arg1: i32, %arg2: i32, %arg3: i32) -> (i32, i32, i32) {
    %c0_i32 = arith.constant 0 : i32
    %c0_i32_0 = arith.constant 0 : i32
    %c0_i32_1 = arith.constant 0 : i32
    %c0_i32_2 = arith.constant 0 : i32
    return %c0_i32, %c0_i32_0, %c0_i32_1 : i32, i32, i32
  }
  func.func @transform_5(%arg0: i32, %arg1: i32, %arg2: i32, %arg3: i32) -> (i32, i32) {
    %c0_i32 = arith.constant 0 : i32
    %c0_i32_0 = arith.constant 0 : i32
    %c0_i32_1 = arith.constant 0 : i32
    return %c0_i32, %c0_i32_0 : i32, i32
  }
  func.func @transform_6(%arg0: i32, %arg1: i32, %arg2: i32, %arg3: i32) -> (i32, i32) {
    %c0_i32 = arith.constant 0 : i32
    %c0_i32_0 = arith.constant 0 : i32
    %c0_i32_1 = arith.constant 0 : i32
    return %c0_i32, %c0_i32_0 : i32, i32
  }
  func.func @transform_7(%arg0: i32, %arg1: i32, %arg2: i32, %arg3: i32) -> (i32, i32, i32, i32) {
    %c1_i32 = arith.constant 1 : i32
    %0 = arith.muli %arg2, %c1_i32 : i32
    %1 = arith.addi %0, %arg3 : i32
    %c0_i32 = arith.constant 0 : i32
    %c0_i32_0 = arith.constant 0 : i32
    return %arg0, %arg1, %c0_i32, %1 : i32, i32, i32, i32
  }
}

</mosaic_0001>

<llo_original>
// kernel: tpu_custom_call.1
$region0: #{tpu_custom_call.1}
  #allocation0 [shape = 'u32[]', space=smem, size = 0x4, offset = 0x4, fixed_abs, tag = 'smem constant byte address 0x4 - core index']
  #allocation1 [shape = 'u32[144,128]{1,0:T(1,128)}', space=vmem, size = 0x12000, scoped, tag = 'internal scratch']
  #allocation2 [shape = 'f32[32,1024]{1,0:T(8,128)}', space=vmem, size = 0x20000, scoped, tag = 'scratch operand']
  #allocation3 [shape = 'f32[32,1024]{1,0:T(8,128)}', space=vmem, size = 0x20000, scoped, tag = 'scratch operand']
  %s0 = inlined_call_operand.vmem [shape: f32[2,1,64,8], index: 0, kind: input, shape index: {}]
  %s1 = inlined_call_operand.vmem [shape: f32[2,8,128], index: 1, kind: input, shape index: {}]
  %s2 = inlined_call_operand.vmem [shape: f32[32,8], index: 2, kind: input, shape index: {}]
  %s3 = inlined_call_operand.vmem [shape: f32[2,32,32], index: 3, kind: input, shape index: {}]
  %s4 = inlined_call_operand.vmem [shape: f32[2,32,1], index: 4, kind: input, shape index: {}]
  %s5 = inlined_call_operand.vmem [shape: f32[3,32], index: 5, kind: input, shape index: {}]
  %s6 = inlined_call_operand.vmem [shape: f32[3,1], index: 6, kind: input, shape index: {}]
  %s7 = inlined_call_operand.vmem [shape: f32[2,8,3,128], index: 7, kind: output, shape index: {}]
  %s8 = sld [smem:[#allocation0]]
  $region65: #{tpu_custom_call.1} parent=0
    _
  %s10 = ssub.s32 1, %s8
  %s11 = scalar_select 0, %s10, %s8
  loop: start=0, step=1, limit=4
  $region2: #{tpu_custom_call.1} parent=0 // loop_pre_header
    _
  $region3: #{tpu_custom_call.1} parent=0 // loop_header
    %s13 = sphi 0, %s17
    %p14 = scmp.ge.s32.totalorder %s13, 4
    %s20 = sphi 0, %s46
    %s21 = sphi 0, %s42
    %s22 = sphi 0, %s38
    %s23 = sphi 0, %s34
    %s24 = sphi 0, %s20
    %s25 = sphi 0, %s21
    %s26 = sphi 0, %s22
    %s27 = sphi 0, %s23
    %s28 = sphi 0, %s24
    %s29 = sphi 0, %s25
    %s30 = sphi 0, %s26
    %s31 = sphi 0, %s27
    %s51 = sphi 0, %s53
    %s54 = sphi 0, %s51
    %s55 = sphi 0, %s54
    %s71 = sphi 0, %s55
    %s81 = sphi 0, %s83
    %s84 = sphi 0, %s81
    %s85 = sphi 0, %s84
    %s101 = sphi 0, %s85
    %s105 = sphi 0, %s105
    %s107 = sphi 0, %s105
    %s108 = sphi 0, %s107
    %s122 = sphi 0, %s108
    %s126 = sphi 0, %s126
    %s128 = sphi 0, %s126
    %s129 = sphi 0, %s128
    %s143 = sphi 0, %s129
    %s147 = sphi 0, %s147
    %s149 = sphi 0, %s147
    %s150 = sphi 0, %s149
    %s164 = sphi 0, %s150
    %s168 = sphi 0, %s168
    %s170 = sphi 0, %s168
    %s171 = sphi 0, %s170
    %s185 = sphi 0, %s171
    %s189 = sphi 0, %s189
    %s191 = sphi 0, %s189
    %s192 = sphi 0, %s191
    %s206 = sphi 0, %s192
    %s218 = sphi 0, %s220
    %s221 = sphi 0, %s218
    %s222 = sphi 0, %s221
    %s238 = sphi 0, %s222
  $region4: #{tpu_custom_call.1} parent=0 // loop_header_branch
    %16 = sbr.rel (%p14) target = $region8
  $region5: #{tpu_custom_call.1} parent=0 // loop_body
    %s18 = ssub.s32 %s13, 1
    %s19 = ssub.s32 %s13, 2
    %s32 = sadd.s32 1, %s23
    %p33 = scmp.ge.s32.totalorder %s32, 1
    %s34 = scalar_select %p33, 0, %s32
    %s35 = sadd.s32 1, %s22
    %s36 = scalar_select %p33, %s35, %s22
    %p37 = scmp.ge.s32.totalorder %s36, 1
    %s38 = scalar_select %p37, 0, %s36
    %s39 = sadd.s32 1, %s21
    %s40 = scalar_select %p37, %s39, %s21
    %p41 = scmp.ge.s32.totalorder %s40, 1
    %s42 = scalar_select %p41, 0, %s40
    %s43 = sadd.s32 1, %s20
    %s44 = scalar_select %p41, %s43, %s20
    %p45 = scmp.ge.s32.totalorder %s44, 2
    %s46 = scalar_select %p45, 0, %s44
    %s47 = ssub.s32 %s20, %s46
    %s48 = ssub.s32 %s21, %s42
    %s49 = sor.u32 %s47, %s48
    %p50 = scmp.eq.s32.totalorder %s49, 0
    %s52 = sadd.s32 %s51, 1
    %s53 = scalar_select %p50, %s51, %s52
    %p56 = pneg %p50
    %p57 = scmp.eq.s32.totalorder %s13, 1
    %p58 = por %p56, %p57
    %p59 = scmp.ne.s32.totalorder %s51, %s54
    %p60 = scmp.eq.s32.totalorder %s13, 0
    %p61 = por %p59, %p60
    %p62 = scmp.ne.s32.totalorder %s51, %s54
    %p63 = scmp.eq.s32.totalorder %s18, 1
    %p64 = por %p62, %p63
    %p65 = scmp.ne.s32.totalorder %s54, %s55
    %p66 = scmp.eq.s32.totalorder %s18, 0
    %p67 = por %p65, %p66
    %p68 = scmp.ne.s32.totalorder %s54, %s55
    %p69 = scmp.eq.s32.totalorder %s19, 1
    %p70 = por %p68, %p69
    %p72 = scmp.ne.s32.totalorder %s55, %s71
    %p73 = scmp.eq.s32.totalorder %s19, 0
    %p74 = por %p72, %p73
    %s75 = sadd.s32 %s22, %s23
    %s76 = sadd.s32 %s38, %s34
    %s77 = ssub.s32 %s20, %s46
    %s78 = ssub.s32 %s75, %s76
    %s79 = sor.u32 %s77, %s78
    %p80 = scmp.eq.s32.totalorder %s79, 0
    %s82 = sadd.s32 %s81, 1
    %s83 = scalar_select %p80, %s81, %s82
    %p86 = pneg %p80
    %p87 = scmp.eq.s32.totalorder %s13, 1
    %p88 = por %p86, %p87
    %p89 = scmp.ne.s32.totalorder %s81, %s84
    %p90 = scmp.eq.s32.totalorder %s13, 0
    %p91 = por %p89, %p90
    %p92 = scmp.ne.s32.totalorder %s81, %s84
    %p93 = scmp.eq.s32.totalorder %s18, 1
    %p94 = por %p92, %p93
    %p95 = scmp.ne.s32.totalorder %s84, %s85
    %p96 = scmp.eq.s32.totalorder %s18, 0
    %p97 = por %p95, %p96
    %p98 = scmp.ne.s32.totalorder %s84, %s85
    %p99 = scmp.eq.s32.totalorder %s19, 1
    %p100 = por %p98, %p99
    %p102 = scmp.ne.s32.totalorder %s85, %s101
    %p103 = scmp.eq.s32.totalorder %s19, 0
    %p104 = por %p102, %p103
    %s106 = sadd.s32 %s105, 1
    %p109 = scmp.eq.s32.totalorder %s13, 1
    %p110 = scmp.ne.s32.totalorder %s105, %s107
    %p111 = scmp.eq.s32.totalorder %s13, 0
    %p112 = por %p110, %p111
    %p113 = scmp.ne.s32.totalorder %s105, %s107
    %p114 = scmp.eq.s32.totalorder %s18, 1
    %p115 = por %p113, %p114
    %p116 = scmp.ne.s32.totalorder %s107, %s108
    %p117 = scmp.eq.s32.totalorder %s18, 0
    %p118 = por %p116, %p117
    %p119 = scmp.ne.s32.totalorder %s107, %s108
    %p120 = scmp.eq.s32.totalorder %s19, 1
    %p121 = por %p119, %p120
    %p123 = scmp.ne.s32.totalorder %s108, %s122
    %p124 = scmp.eq.s32.totalorder %s19, 0
    %p125 = por %p123, %p124
    %s127 = sadd.s32 %s126, 1
    %p130 = scmp.eq.s32.totalorder %s13, 1
    %p131 = scmp.ne.s32.totalorder %s126, %s128
    %p132 = scmp.eq.s32.totalorder %s13, 0
    %p133 = por %p131, %p132
    %p134 = scmp.ne.s32.totalorder %s126, %s128
    %p135 = scmp.eq.s32.totalorder %s18, 1
    %p136 = por %p134, %p135
    %p137 = scmp.ne.s32.totalorder %s128, %s129
    %p138 = scmp.eq.s32.totalorder %s18, 0
    %p139 = por %p137, %p138
    %p140 = scmp.ne.s32.totalorder %s128, %s129
    %p141 = scmp.eq.s32.totalorder %s19, 1
    %p142 = por %p140, %p141
    %p144 = scmp.ne.s32.totalorder %s129, %s143
    %p145 = scmp.eq.s32.totalorder %s19, 0
    %p146 = por %p144, %p145
    %s148 = sadd.s32 %s147, 1
    %p151 = scmp.eq.s32.totalorder %s13, 1
    %p152 = scmp.ne.s32.totalorder %s147, %s149
    %p153 = scmp.eq.s32.totalorder %s13, 0
    %p154 = por %p152, %p153
    %p155 = scmp.ne.s32.totalorder %s147, %s149
    %p156 = scmp.eq.s32.totalorder %s18, 1
    %p157 = por %p155, %p156
    %p158 = scmp.ne.s32.totalorder %s149, %s150
    %p159 = scmp.eq.s32.totalorder %s18, 0
    %p160 = por %p158, %p159
    %p161 = scmp.ne.s32.totalorder %s149, %s150
    %p162 = scmp.eq.s32.totalorder %s19, 1
    %p163 = por %p161, %p162
    %p165 = scmp.ne.s32.totalorder %s150, %s164
    %p166 = scmp.eq.s32.totalorder %s19, 0
    %p167 = por %p165, %p166
    %s169 = sadd.s32 %s168, 1
    %p172 = scmp.eq.s32.totalorder %s13, 1
    %p173 = scmp.ne.s32.totalorder %s168, %s170
    %p174 = scmp.eq.s32.totalorder %s13, 0
    %p175 = por %p173, %p174
    %p176 = scmp.ne.s32.totalorder %s168, %s170
    %p177 = scmp.eq.s32.totalorder %s18, 1
    %p178 = por %p176, %p177
    %p179 = scmp.ne.s32.totalorder %s170, %s171
    %p180 = scmp.eq.s32.totalorder %s18, 0
    %p181 = por %p179, %p180
    %p182 = scmp.ne.s32.totalorder %s170, %s171
    %p183 = scmp.eq.s32.totalorder %s19, 1
    %p184 = por %p182, %p183
    %p186 = scmp.ne.s32.totalorder %s171, %s185
    %p187 = scmp.eq.s32.totalorder %s19, 0
    %p188 = por %p186, %p187
    %s190 = sadd.s32 %s189, 1
    %p193 = scmp.eq.s32.totalorder %s13, 1
    %p194 = scmp.ne.s32.totalorder %s189, %s191
    %p195 = scmp.eq.s32.totalorder %s13, 0
    %p196 = por %p194, %p195
    %p197 = scmp.ne.s32.totalorder %s189, %s191
    %p198 = scmp.eq.s32.totalorder %s18, 1
    %p199 = por %p197, %p198
    %p200 = scmp.ne.s32.totalorder %s191, %s192
    %p201 = scmp.eq.s32.totalorder %s18, 0
    %p202 = por %p200, %p201
    %p203 = scmp.ne.s32.totalorder %s191, %s192
    %p204 = scmp.eq.s32.totalorder %s19, 1
    %p205 = por %p203, %p204
    %p207 = scmp.ne.s32.totalorder %s192, %s206
    %p208 = scmp.eq.s32.totalorder %s19, 0
    %p209 = por %p207, %p208
    %s210 = sadd.s32 %s22, %s23
    %s211 = sadd.s32 %s38, %s34
    %s212 = ssub.s32 %s20, %s46
    %s213 = ssub.s32 %s21, %s42
    %s214 = sor.u32 %s212, %s213
    %s215 = ssub.s32 %s210, %s211
    %s216 = sor.u32 %s214, %s215
    %p217 = scmp.eq.s32.totalorder %s216, 0
    %s219 = sadd.s32 %s218, 1
    %s220 = scalar_select %p217, %s218, %s219
    %p223 = pneg %p217
    %p224 = scmp.eq.s32.totalorder %s13, 1
    %p225 = por %p223, %p224
    %p226 = scmp.ne.s32.totalorder %s218, %s221
    %p227 = scmp.eq.s32.totalorder %s13, 0
    %p228 = por %p226, %p227
    %p229 = scmp.ne.s32.totalorder %s218, %s221
    %p230 = scmp.eq.s32.totalorder %s18, 1
    %p231 = por %p229, %p230
    %p232 = scmp.ne.s32.totalorder %s221, %s222
    %p233 = scmp.eq.s32.totalorder %s18, 0
    %p234 = por %p232, %p233
    %p235 = scmp.ne.s32.totalorder %s221, %s222
    %p236 = scmp.eq.s32.totalorder %s19, 1
    %p237 = por %p235, %p236
    %p239 = scmp.ne.s32.totalorder %s222, %s238
    %p240 = scmp.eq.s32.totalorder %s19, 0
    %p241 = por %p239, %p240
    %p242 = scmp.le.s32.totalorder 1, %s13
    %p243 = scmp.lt.s32.totalorder %s13, 3
    %p244 = pnand %p242, %p243
    %p245 = pneg %p244
    // Predicated region
    $region9: #{tpu_custom_call.1} parent=5 // pred_check
      _
    $region10: #{tpu_custom_call.1} parent=5 // pred_check_branch
      %247 = sbr.rel (%p244) target = $region12
    $region11: #{tpu_custom_call.1} parent=5 // pred_region
      %s248 = ssub.s32 %s13, 1
      // Predicated region
      $region13: #{tpu_custom_call.1} parent=11 // pred_check
        %p249 = pneg %p118
      $region14: #{tpu_custom_call.1} parent=11 // pred_check_branch
        %251 = sbr.rel (%p249) target = $region16
      $region15: #{tpu_custom_call.1} parent=11 // pred_region
        _
      $region16: #{tpu_custom_call.1} parent=11 // pred_fallthru
        _
      // Predicated region
      $region17: #{tpu_custom_call.1} parent=11 // pred_check
        %p252 = pneg %p139
      $region18: #{tpu_custom_call.1} parent=11 // pred_check_branch
        %254 = sbr.rel (%p252) target = $region20
      $region19: #{tpu_custom_call.1} parent=11 // pred_region
        _
      $region20: #{tpu_custom_call.1} parent=11 // pred_fallthru
        _
      // Predicated region
      $region21: #{tpu_custom_call.1} parent=11 // pred_check
        %p255 = pneg %p160
      $region22: #{tpu_custom_call.1} parent=11 // pred_check_branch
        %257 = sbr.rel (%p255) target = $region24
      $region23: #{tpu_custom_call.1} parent=11 // pred_region
        _
      $region24: #{tpu_custom_call.1} parent=11 // pred_fallthru
        _
      // Predicated region
      $region25: #{tpu_custom_call.1} parent=11 // pred_check
        %p258 = pneg %p181
      $region26: #{tpu_custom_call.1} parent=11 // pred_check_branch
        %260 = sbr.rel (%p258) target = $region28
      $region27: #{tpu_custom_call.1} parent=11 // pred_region
        _
      $region28: #{tpu_custom_call.1} parent=11 // pred_fallthru
        _
      // Predicated region
      $region29: #{tpu_custom_call.1} parent=11 // pred_check
        %p261 = pneg %p202
      $region30: #{tpu_custom_call.1} parent=11 // pred_check_branch
        %263 = sbr.rel (%p261) target = $region32
      $region31: #{tpu_custom_call.1} parent=11 // pred_region
        _
      $region32: #{tpu_custom_call.1} parent=11 // pred_fallthru
        _
    $region12: #{tpu_custom_call.1} parent=5 // pred_fallthru
      _
    %p264 = scmp.lt.s32.totalorder %s13, 2
    // Predicated region
    $region33: #{tpu_custom_call.1} parent=5 // pred_check
      %p265 = pneg %p264
    $region34: #{tpu_custom_call.1} parent=5 // pred_check_branch
      %267 = sbr.rel (%p265) target = $region36
    $region35: #{tpu_custom_call.1} parent=5 // pred_region
      // Predicated region
      $region37: #{tpu_custom_call.1} parent=35 // pred_check
        %p268 = pneg %p61
      $region38: #{tpu_custom_call.1} parent=35 // pred_check_branch
        %270 = sbr.rel (%p268) target = $region40
      $region39: #{tpu_custom_call.1} parent=35 // pred_region
        %p271 = scmp.lt.s32.totalorder %s20, 1
        %s272 = scalar_select %p271, %s20, 1
        %p273 = scmp.lt.s32.totalorder %s21, 0
        %s274 = scalar_select %p273, %s21, 0
        %s275 = smul.addr %s274, 8
        %s276 = smul.addr %s272, 8
        %s277 = sadd.s32 %s275, %s276
        %s278 = smul.addr %s277, 8
        %s279 = scalar_lea.vmem %s0, %s278
      $region40: #{tpu_custom_call.1} parent=35 // pred_fallthru
        _
      // Predicated region
      $region41: #{tpu_custom_call.1} parent=35 // pred_check
        %p280 = pneg %p91
      $region42: #{tpu_custom_call.1} parent=35 // pred_check_branch
        %282 = sbr.rel (%p280) target = $region44
      $region43: #{tpu_custom_call.1} parent=35 // pred_region
        %s283 = sadd.s32 %s22, %s23
        %p284 = scmp.lt.s32.totalorder %s20, 1
        %s285 = scalar_select %p284, %s20, 1
        %p286 = scmp.lt.s32.totalorder %s283, 0
        %s287 = scalar_select %p286, %s283, 0
        %s288 = sadd.s32 %s287, %s285
        %s289 = smul.addr %s288, 8
        %s290 = scalar_lea.vmem %s1, %s289
        %s291 = sadd.s32 %s22, %s23
      $region44: #{tpu_custom_call.1} parent=35 // pred_fallthru
        _
    $region36: #{tpu_custom_call.1} parent=5 // pred_fallthru
      _
    %p292 = scmp.le.s32.totalorder 1, %s13
    %p293 = scmp.lt.s32.totalorder %s13, 3
    %p294 = pnand %p292, %p293
    %p295 = pneg %p294
    // Predicated region
    $region45: #{tpu_custom_call.1} parent=5 // pred_check
      _
    $region46: #{tpu_custom_call.1} parent=5 // pred_check_branch
      %297 = sbr.rel (%p294) target = $region48
    $region47: #{tpu_custom_call.1} parent=5 // pred_region
      %s298 = ssub.s32 %s13, 1
      %p299 = scmp.lt.s32.totalorder %s24, 1
      %s300 = scalar_select %p299, %s24, 1
      %p301 = scmp.lt.s32.totalorder %s25, 0
      %s302 = scalar_select %p301, %s25, 0
      %s303 = smul.addr %s302, 8
      %s304 = smul.addr %s300, 8
      %s305 = sadd.s32 %s303, %s304
      %s306 = smul.addr %s305, 8
      %s307 = scalar_lea.vmem %s0, %s306
      %p308 = pneg %p67
      %p309 = pneg %p64
      %s310 = sadd.s32 %s26, %s27
      %p311 = scmp.lt.s32.totalorder %s24, 1
      %s312 = scalar_select %p311, %s24, 1
      %p313 = scmp.lt.s32.totalorder %s310, 0
      %s314 = scalar_select %p313, %s310, 0
      %s315 = sadd.s32 %s314, %s312
      %s316 = smul.addr %s315, 8
      %s317 = scalar_lea.vmem %s1, %s316
      %p318 = pneg %p97
      %p319 = pneg %p94
      %p320 = pneg %p118
      %p321 = pneg %p115
      %p322 = pneg %p139
      %p323 = pneg %p136
      %p324 = pneg %p160
      %p325 = pneg %p157
      %p326 = pneg %p181
      %p327 = pneg %p178
      %p328 = pneg %p202
      %p329 = pneg %p199
      %p330 = pneg %p234
      %p331 = pneg %p231
      %s332 = sadd.s32 %s26, %s27
      %s333 = smul.u32 8, %s25
      %p334 = scmp.lt.s32.totalorder %s24, 1
      %s335 = scalar_select %p334, %s24, 1
      %p336 = scmp.lt.s32.totalorder %s333, 7
      %s337 = scalar_select %p336, %s333, 7
      %p338 = scmp.lt.s32.totalorder %s332, 0
      %s339 = scalar_select %p338, %s332, 0
      %s340 = sadd.s32 %s339, %s337
      %s341 = smul.addr %s335, 8
      %s342 = sadd.s32 %s340, %s341
      %s343 = smul.addr %s342, 4
      %s344 = scalar_lea.vmem %s7, %s343
      %p345 = scmp.lt.s32.totalorder %s24, 1
      %s346 = scalar_select %p345, %s24, 1
      %p347 = scmp.lt.s32.totalorder %s25, 0
      %s348 = scalar_select %p347, %s25, 0
      %s349 = smul.addr %s348, 8
      %s350 = smul.addr %s346, 8
      %s351 = sadd.s32 %s349, %s350
      %s352 = smul.addr %s351, 8
      %s353 = scalar_lea.vmem %s0, %s352
      %s354 = sadd.s32 %s26, %s27
      %p355 = scmp.lt.s32.totalorder %s24, 1
      %s356 = scalar_select %p355, %s24, 1
      %p357 = scmp.lt.s32.totalorder %s354, 0
      %s358 = scalar_select %p357, %s354, 0
      %s359 = sadd.s32 %s358, %s356
      %s360 = smul.addr %s359, 8
      %s361 = scalar_lea.vmem %s1, %s360
      %s362 = sadd.s32 %s26, %s27
      %s363 = sadd.s32 %s26, %s27
      %s364 = smul.u32 8, %s25
      %p365 = scmp.lt.s32.totalorder %s24, 1
      %s366 = scalar_select %p365, %s24, 1
      %p367 = scmp.lt.s32.totalorder %s364, 7
      %s368 = scalar_select %p367, %s364, 7
      %p369 = scmp.lt.s32.totalorder %s363, 0
      %s370 = scalar_select %p369, %s363, 0
      %s371 = sadd.s32 %s370, %s368
      %s372 = smul.addr %s366, 8
      %s373 = sadd.s32 %s371, %s372
      %s374 = smul.addr %s373, 4
      %s375 = scalar_lea.vmem %s7, %s374
      %s376 = sadd.s32 %s26, %s27
      %s377 = smul.u32 8, %s25
      %p378 = scmp.eq.s32.totalorder %s27, 0
      // Predicated region
      $region49: #{tpu_custom_call.1} parent=47 // pred_check
        %p379 = pneg %p378
      $region50: #{tpu_custom_call.1} parent=47 // pred_check_branch
        %381 = sbr.rel (%p379) target = $region52
      $region51: #{tpu_custom_call.1} parent=47 // pred_region
        %v382 = vld [vmem:[%s353] sm:$0xff]
        %v383 = vld [vmem:[%s353 + $0x8] sm:$0xff]
        %v384 = vld [vmem:[%s353 + $0x10] sm:$0xff]
        %v385 = vld [vmem:[%s353 + $0x18] sm:$0xff]
        %v386 = vld [vmem:[%s353 + $0x20] sm:$0xff]
        %v387 = vld [vmem:[%s353 + $0x28] sm:$0xff]
        %v388 = vld [vmem:[%s353 + $0x30] sm:$0xff]
        %v389 = vld [vmem:[%s353 + $0x38] sm:$0xff]
        %v390 = vlaneseq
        %v391 = vshrl.u32 %v390, 7
        %v392 = vlaneseq
        %v393 = vand.u32 %v392, 127
        %v394 = vadd.s32 %v393, 128
        %v395 = vadd.s32 %v393, 256
        %v396 = vadd.s32 %v393, 384
        %v397 = vadd.s32 %v393, 512
        %v398 = vadd.s32 %v393, 640
        %v399 = vadd.s32 %v393, 768
        %v400 = vadd.s32 %v393, 896
        %v401 = vmul.u32 %v391, 128
        %v402 = vsub.s32 %v393, %v401
        %v403 = vsub.s32 %v394, %v401
        %v404 = vsub.s32 %v395, %v401
        %v405 = vsub.s32 %v396, %v401
        %v406 = vsub.s32 %v397, %v401
        %v407 = vsub.s32 %v398, %v401
        %v408 = vsub.s32 %v399, %v401
        %v409 = vsub.s32 %v400, %v401
        %vm410 = vcmp.ge.s32.totalorder %v402, 0
        %vm411 = vcmp.ge.s32.totalorder %v403, 0
        %vm412 = vcmp.ge.s32.totalorder %v404, 0
        %vm413 = vcmp.ge.s32.totalorder %v405, 0
        %vm414 = vcmp.ge.s32.totalorder %v406, 0
        %vm415 = vcmp.ge.s32.totalorder %v407, 0
        %vm416 = vcmp.ge.s32.totalorder %v408, 0
        %vm417 = vcmp.ge.s32.totalorder %v409, 0
        %vm418 = vcmp.lt.s32.totalorder %v402, 128
        %vm419 = vcmp.lt.s32.totalorder %v403, 128
        %vm420 = vcmp.lt.s32.totalorder %v404, 128
        %vm421 = vcmp.lt.s32.totalorder %v405, 128
        %vm422 = vcmp.lt.s32.totalorder %v406, 128
        %vm423 = vcmp.lt.s32.totalorder %v407, 128
        %vm424 = vcmp.lt.s32.totalorder %v408, 128
        %vm425 = vcmp.lt.s32.totalorder %v409, 128
        %vm426 = vmand %vm410, %vm418
        %vm427 = vmand %vm411, %vm419
        %vm428 = vmand %vm412, %vm420
        %vm429 = vmand %vm413, %vm421
        %vm430 = vmand %vm414, %vm422
        %vm431 = vmand %vm415, %vm423
        %vm432 = vmand %vm416, %vm424
        %vm433 = vmand %vm417, %vm425
        %v434 = vsel %vm426, 1.0, 0.0
        %v435 = vsel %vm427, 1.0, 0.0
        %v436 = vsel %vm428, 1.0, 0.0
        %v437 = vsel %vm429, 1.0, 0.0
        %v438 = vsel %vm430, 1.0, 0.0
        %v439 = vsel %vm431, 1.0, 0.0
        %v440 = vsel %vm432, 1.0, 0.0
        %v441 = vsel %vm433, 1.0, 0.0
        %vm442 = vcmask 64512
        %v444 = vsel %vm442, %v382, 0
        %v447 = vsel %vm442, %v383, 0
        %v450 = vsel %vm442, %v384, 0
        %v453 = vsel %vm442, %v385, 0
        %v456 = vsel %vm442, %v386, 0
        %v459 = vsel %vm442, %v387, 0
        %v462 = vsel %vm442, %v388, 0
        %v465 = vsel %vm442, %v389, 0
        %467 = vmatprep.subr.mxu0 0.0
        %468 = vmatpush1.msra.mxu0 0.0
        %469 = vmatprep.subr.mxu0 0.0
        %470 = vmatpush1.msra.mxu0 0.0
        %471 = vmatprep.subr.mxu0 0.0
        %472 = vmatpush1.msra.mxu0 0.0
        %473 = vmatprep.subr.mxu0 0.0
        %474 = vmatpush1.msra.mxu0 0.0
        %475 = vmatprep.subr.mxu0 0.0
        %476 = vmatpush1.msra.mxu0 0.0
        %477 = vmatprep.subr.mxu0 0.0
        %478 = vmatpush1.msra.mxu0 0.0
        %479 = vmatprep.subr.mxu0 0.0
        %480 = vmatpush1.msra.mxu0 0.0
        %481 = vmatprep.subr.mxu0 0.0
        %482 = vmatpush1.msra.mxu0 0.0
        %483 = vmatprep.subr.mxu0 0.0
        %484 = vmatpush1.msra.mxu0 0.0
        %485 = vmatprep.subr.mxu0 0.0
        %486 = vmatpush1.msra.mxu0 0.0
        %487 = vmatprep.subr.mxu0 0.0
        %488 = vmatpush1.msra.mxu0 0.0
        %489 = vmatprep.subr.mxu0 0.0
        %490 = vmatpush1.msra.mxu0 0.0
        %491 = vmatprep.subr.mxu0 0.0
        %492 = vmatpush1.msra.mxu0 0.0
        %493 = vmatprep.subr.mxu0 0.0
        %494 = vmatpush1.msra.mxu0 0.0
        %495 = vmatprep.subr.mxu0 0.0
        %496 = vmatpush1.msra.mxu0 0.0
        %497 = vmatprep.subr.mxu0 %v435
        %498 = vmatpush1.msra.mxu0 %v434
        %499 = vmatprep.subr.mxu0 0.0
        %500 = vmatpush2.msra.mxu0 0.0
        %501 = vmatprep.subr.mxu0 0.0
        %502 = vmatpush2.msra.mxu0 0.0
        %503 = vmatprep.subr.mxu0 0.0
        %504 = vmatpush2.msra.mxu0 0.0
        %505 = vmatprep.subr.mxu0 0.0
        %506 = vmatpush2.msra.mxu0 0.0
        %507 = vmatprep.subr.mxu0 0.0
        %508 = vmatpush2.msra.mxu0 0.0
        %509 = vmatprep.subr.mxu0 0.0
        %510 = vmatpush2.msra.mxu0 0.0
        %511 = vmatprep.subr.mxu0 0.0
        %512 = vmatpush2.msra.mxu0 0.0
        %513 = vmatprep.subr.mxu0 0.0
        %514 = vmatpush2.msra.mxu0 0.0
        %515 = vmatprep.subr.mxu0 0.0
        %516 = vmatpush2.msra.mxu0 0.0
        %517 = vmatprep.subr.mxu0 0.0
        %518 = vmatpush2.msra.mxu0 0.0
        %519 = vmatprep.subr.mxu0 0.0
        %520 = vmatpush2.msra.mxu0 0.0
        %521 = vmatprep.subr.mxu0 0.0
        %522 = vmatpush2.msra.mxu0 0.0
        %523 = vmatprep.subr.mxu0 0.0
        %524 = vmatpush2.msra.mxu0 0.0
        %525 = vmatprep.subr.mxu0 0.0
        %526 = vmatpush2.msra.mxu0 0.0
        %527 = vmatprep.subr.mxu0 0.0
        %528 = vmatpush2.msra.mxu0 0.0
        %529 = vmatprep.subr.mxu0 0.0
        %530 = vmatpush2.msra.mxu0 0.0
        %531 = vmatprep.mubr.f32.mxu0 0.0
        %532 = vmatmul.mubr.f32.gmra.mxu0 %v444
        %v533 = vpop.f32.mrf.mxu0
        %v534 = vadd.f32 0.0, %v533
        %v535 = vpop.f32.mrf.mxu0
        %v536 = vadd.f32 0.0, %v535
        %537 = vmatprep.mubr.f32.mxu0 0.0
        %538 = vmatmul.mubr.f32.gmra.mxu0 %v447
        %v539 = vpop.f32.mrf.mxu0
        %v540 = vadd.f32 0.0, %v539
        %v541 = vpop.f32.mrf.mxu0
        %v542 = vadd.f32 0.0, %v541
        %543 = vmatprep.mubr.f32.mxu0 0.0
        %544 = vmatmul.mubr.f32.gmra.mxu0 %v450
        %v545 = vpop.f32.mrf.mxu0
        %v546 = vadd.f32 0.0, %v545
        %v547 = vpop.f32.mrf.mxu0
        %v548 = vadd.f32 0.0, %v547
        %549 = vmatprep.mubr.f32.mxu0 0.0
        %550 = vmatmul.mubr.f32.gmra.mxu0 %v453
        %v551 = vpop.f32.mrf.mxu0
        %v552 = vadd.f32 0.0, %v551
        %v553 = vpop.f32.mrf.mxu0
        %v554 = vadd.f32 0.0, %v553
        %555 = vmatprep.mubr.f32.mxu0 0.0
        %556 = vmatmul.mubr.f32.gmra.mxu0 %v456
        %v557 = vpop.f32.mrf.mxu0
        %v558 = vadd.f32 0.0, %v557
        %v559 = vpop.f32.mrf.mxu0
        %v560 = vadd.f32 0.0, %v559
        %561 = vmatprep.mubr.f32.mxu0 0.0
        %562 = vmatmul.mubr.f32.gmra.mxu0 %v459
        %v563 = vpop.f32.mrf.mxu0
        %v564 = vadd.f32 0.0, %v563
        %v565 = vpop.f32.mrf.mxu0
        %v566 = vadd.f32 0.0, %v565
        %567 = vmatprep.mubr.f32.mxu0 0.0
        %568 = vmatmul.mubr.f32.gmra.mxu0 %v462
        %v569 = vpop.f32.mrf.mxu0
        %v570 = vadd.f32 0.0, %v569
        %v571 = vpop.f32.mrf.mxu0
        %v572 = vadd.f32 0.0, %v571
        %573 = vmatprep.mubr.f32.mxu0 0.0
        %574 = vmatmul.mubr.f32.gmra.mxu0 %v465
        %v575 = vpop.f32.mrf.mxu0
        %v576 = vadd.f32 0.0, %v575
        %v577 = vpop.f32.mrf.mxu0
        %v578 = vadd.f32 0.0, %v577
        %579 = vdwg.mxu0
        %580 = vmatprep.subr.mxu0 0.0
        %581 = vmatpush1.msra.mxu0 0.0
        %582 = vmatprep.subr.mxu0 0.0
        %583 = vmatpush1.msra.mxu0 0.0
        %584 = vmatprep.subr.mxu0 0.0
        %585 = vmatpush1.msra.mxu0 0.0
        %586 = vmatprep.subr.mxu0 0.0
        %587 = vmatpush1.msra.mxu0 0.0
        %588 = vmatprep.subr.mxu0 0.0
        %589 = vmatpush1.msra.mxu0 0.0
        %590 = vmatprep.subr.mxu0 0.0
        %591 = vmatpush1.msra.mxu0 0.0
        %592 = vmatprep.subr.mxu0 0.0
        %593 = vmatpush1.msra.mxu0 0.0
        %594 = vmatprep.subr.mxu0 0.0
        %595 = vmatpush1.msra.mxu0 0.0
        %596 = vmatprep.subr.mxu0 0.0
        %597 = vmatpush1.msra.mxu0 0.0
        %598 = vmatprep.subr.mxu0 0.0
        %599 = vmatpush1.msra.mxu0 0.0
        %600 = vmatprep.subr.mxu0 0.0
        %601 = vmatpush1.msra.mxu0 0.0
        %602 = vmatprep.subr.mxu0 0.0
        %603 = vmatpush1.msra.mxu0 0.0
        %604 = vmatprep.subr.mxu0 0.0
        %605 = vmatpush1.msra.mxu0 0.0
        %606 = vmatprep.subr.mxu0 0.0
        %607 = vmatpush1.msra.mxu0 0.0
        %608 = vmatprep.subr.mxu0 0.0
        %609 = vmatpush1.msra.mxu0 0.0
        %610 = vmatprep.subr.mxu0 %v437
        %611 = vmatpush1.msra.mxu0 %v436
        %612 = vmatprep.subr.mxu0 0.0
        %613 = vmatpush2.msra.mxu0 0.0
        %614 = vmatprep.subr.mxu0 0.0
        %615 = vmatpush2.msra.mxu0 0.0
        %616 = vmatprep.subr.mxu0 0.0
        %617 = vmatpush2.msra.mxu0 0.0
        %618 = vmatprep.subr.mxu0 0.0
        %619 = vmatpush2.msra.mxu0 0.0
        %620 = vmatprep.subr.mxu0 0.0
        %621 = vmatpush2.msra.mxu0 0.0
        %622 = vmatprep.subr.mxu0 0.0
        %623 = vmatpush2.msra.mxu0 0.0
        %624 = vmatprep.subr.mxu0 0.0
        %625 = vmatpush2.msra.mxu0 0.0
        %626 = vmatprep.subr.mxu0 0.0
        %627 = vmatpush2.msra.mxu0 0.0
        %628 = vmatprep.subr.mxu0 0.0
        %629 = vmatpush2.msra.mxu0 0.0
        %630 = vmatprep.subr.mxu0 0.0
        %631 = vmatpush2.msra.mxu0 0.0
        %632 = vmatprep.subr.mxu0 0.0
        %633 = vmatpush2.msra.mxu0 0.0
        %634 = vmatprep.subr.mxu0 0.0
        %635 = vmatpush2.msra.mxu0 0.0
        %636 = vmatprep.subr.mxu0 0.0
        %637 = vmatpush2.msra.mxu0 0.0
        %638 = vmatprep.subr.mxu0 0.0
        %639 = vmatpush2.msra.mxu0 0.0
        %640 = vmatprep.subr.mxu0 0.0
        %641 = vmatpush2.msra.mxu0 0.0
        %642 = vmatprep.subr.mxu0 0.0
        %643 = vmatpush2.msra.mxu0 0.0
        %644 = vmatprep.mubr.f32.mxu0 0.0
        %645 = vmatmul.mubr.f32.gmra.mxu0 %v444
        %v646 = vpop.f32.mrf.mxu0
        %v647 = vadd.f32 0.0, %v646
        %v648 = vpop.f32.mrf.mxu0
        %v649 = vadd.f32 0.0, %v648
        %650 = vmatprep.mubr.f32.mxu0 0.0
        %651 = vmatmul.mubr.f32.gmra.mxu0 %v447
        %v652 = vpop.f32.mrf.mxu0
        %v653 = vadd.f32 0.0, %v652
        %v654 = vpop.f32.mrf.mxu0
        %v655 = vadd.f32 0.0, %v654
        %656 = vmatprep.mubr.f32.mxu0 0.0
        %657 = vmatmul.mubr.f32.gmra.mxu0 %v450
        %v658 = vpop.f32.mrf.mxu0
        %v659 = vadd.f32 0.0, %v658
        %v660 = vpop.f32.mrf.mxu0
        %v661 = vadd.f32 0.0, %v660
        %662 = vmatprep.mubr.f32.mxu0 0.0
        %663 = vmatmul.mubr.f32.gmra.mxu0 %v453
        %v664 = vpop.f32.mrf.mxu0
        %v665 = vadd.f32 0.0, %v664
        %v666 = vpop.f32.mrf.mxu0
        %v667 = vadd.f32 0.0, %v666
        %668 = vmatprep.mubr.f32.mxu0 0.0
        %669 = vmatmul.mubr.f32.gmra.mxu0 %v456
        %v670 = vpop.f32.mrf.mxu0
        %v671 = vadd.f32 0.0, %v670
        %v672 = vpop.f32.mrf.mxu0
        %v673 = vadd.f32 0.0, %v672
        %674 = vmatprep.mubr.f32.mxu0 0.0
        %675 = vmatmul.mubr.f32.gmra.mxu0 %v459
        %v676 = vpop.f32.mrf.mxu0
        %v677 = vadd.f32 0.0, %v676
        %v678 = vpop.f32.mrf.mxu0
        %v679 = vadd.f32 0.0, %v678
        %680 = vmatprep.mubr.f32.mxu0 0.0
        %681 = vmatmul.mubr.f32.gmra.mxu0 %v462
        %v682 = vpop.f32.mrf.mxu0
        %v683 = vadd.f32 0.0, %v682
        %v684 = vpop.f32.mrf.mxu0
        %v685 = vadd.f32 0.0, %v684
        %686 = vmatprep.mubr.f32.mxu0 0.0
        %687 = vmatmul.mubr.f32.gmra.mxu0 %v465
        %v688 = vpop.f32.mrf.mxu0
        %v689 = vadd.f32 0.0, %v688
        %v690 = vpop.f32.mrf.mxu0
        %v691 = vadd.f32 0.0, %v690
        %692 = vdwg.mxu0
        %693 = vmatprep.subr.mxu0 0.0
        %694 = vmatpush1.msra.mxu0 0.0
        %695 = vmatprep.subr.mxu0 0.0
        %696 = vmatpush1.msra.mxu0 0.0
        %697 = vmatprep.subr.mxu0 0.0
        %698 = vmatpush1.msra.mxu0 0.0
        %699 = vmatprep.subr.mxu0 0.0
        %700 = vmatpush1.msra.mxu0 0.0
        %701 = vmatprep.subr.mxu0 0.0
        %702 = vmatpush1.msra.mxu0 0.0
        %703 = vmatprep.subr.mxu0 0.0
        %704 = vmatpush1.msra.mxu0 0.0
        %705 = vmatprep.subr.mxu0 0.0
        %706 = vmatpush1.msra.mxu0 0.0
        %707 = vmatprep.subr.mxu0 0.0
        %708 = vmatpush1.msra.mxu0 0.0
        %709 = vmatprep.subr.mxu0 0.0
        %710 = vmatpush1.msra.mxu0 0.0
        %711 = vmatprep.subr.mxu0 0.0
        %712 = vmatpush1.msra.mxu0 0.0
        %713 = vmatprep.subr.mxu0 0.0
        %714 = vmatpush1.msra.mxu0 0.0
        %715 = vmatprep.subr.mxu0 0.0
        %716 = vmatpush1.msra.mxu0 0.0
        %717 = vmatprep.subr.mxu0 0.0
        %718 = vmatpush1.msra.mxu0 0.0
        %719 = vmatprep.subr.mxu0 0.0
        %720 = vmatpush1.msra.mxu0 0.0
        %721 = vmatprep.subr.mxu0 0.0
        %722 = vmatpush1.msra.mxu0 0.0
        %723 = vmatprep.subr.mxu0 %v439
        %724 = vmatpush1.msra.mxu0 %v438
        %725 = vmatprep.subr.mxu0 0.0
        %726 = vmatpush2.msra.mxu0 0.0
        %727 = vmatprep.subr.mxu0 0.0
        %728 = vmatpush2.msra.mxu0 0.0
        %729 = vmatprep.subr.mxu0 0.0
        %730 = vmatpush2.msra.mxu0 0.0
        %731 = vmatprep.subr.mxu0 0.0
        %732 = vmatpush2.msra.mxu0 0.0
        %733 = vmatprep.subr.mxu0 0.0
        %734 = vmatpush2.msra.mxu0 0.0
        %735 = vmatprep.subr.mxu0 0.0
        %736 = vmatpush2.msra.mxu0 0.0
        %737 = vmatprep.subr.mxu0 0.0
        %738 = vmatpush2.msra.mxu0 0.0
        %739 = vmatprep.subr.mxu0 0.0
        %740 = vmatpush2.msra.mxu0 0.0
        %741 = vmatprep.subr.mxu0 0.0
        %742 = vmatpush2.msra.mxu0 0.0
        %743 = vmatprep.subr.mxu0 0.0
        %744 = vmatpush2.msra.mxu0 0.0
        %745 = vmatprep.subr.mxu0 0.0
        %746 = vmatpush2.msra.mxu0 0.0
        %747 = vmatprep.subr.mxu0 0.0
        %748 = vmatpush2.msra.mxu0 0.0
        %749 = vmatprep.subr.mxu0 0.0
        %750 = vmatpush2.msra.mxu0 0.0
        %751 = vmatprep.subr.mxu0 0.0
        %752 = vmatpush2.msra.mxu0 0.0
        %753 = vmatprep.subr.mxu0 0.0
        %754 = vmatpush2.msra.mxu0 0.0
        %755 = vmatprep.subr.mxu0 0.0
        %756 = vmatpush2.msra.mxu0 0.0
        %757 = vmatprep.mubr.f32.mxu0 0.0
        %758 = vmatmul.mubr.f32.gmra.mxu0 %v444
        %v759 = vpop.f32.mrf.mxu0
        %v760 = vadd.f32 0.0, %v759
        %v761 = vpop.f32.mrf.mxu0
        %v762 = vadd.f32 0.0, %v761
        %763 = vmatprep.mubr.f32.mxu0 0.0
        %764 = vmatmul.mubr.f32.gmra.mxu0 %v447
        %v765 = vpop.f32.mrf.mxu0
        %v766 = vadd.f32 0.0, %v765
        %v767 = vpop.f32.mrf.mxu0
        %v768 = vadd.f32 0.0, %v767
        %769 = vmatprep.mubr.f32.mxu0 0.0
        %770 = vmatmul.mubr.f32.gmra.mxu0 %v450
        %v771 = vpop.f32.mrf.mxu0
        %v772 = vadd.f32 0.0, %v771
        %v773 = vpop.f32.mrf.mxu0
        %v774 = vadd.f32 0.0, %v773
        %775 = vmatprep.mubr.f32.mxu0 0.0
        %776 = vmatmul.mubr.f32.gmra.mxu0 %v453
        %v777 = vpop.f32.mrf.mxu0
        %v778 = vadd.f32 0.0, %v777
        %v779 = vpop.f32.mrf.mxu0
        %v780 = vadd.f32 0.0, %v779
        %781 = vmatprep.mubr.f32.mxu0 0.0
        %782 = vmatmul.mubr.f32.gmra.mxu0 %v456
        %v783 = vpop.f32.mrf.mxu0
        %v784 = vadd.f32 0.0, %v783
        %v785 = vpop.f32.mrf.mxu0
        %v786 = vadd.f32 0.0, %v785
        %787 = vmatprep.mubr.f32.mxu0 0.0
        %788 = vmatmul.mubr.f32.gmra.mxu0 %v459
        %v789 = vpop.f32.mrf.mxu0
        %v790 = vadd.f32 0.0, %v789
        %v791 = vpop.f32.mrf.mxu0
        %v792 = vadd.f32 0.0, %v791
        %793 = vmatprep.mubr.f32.mxu0 0.0
        %794 = vmatmul.mubr.f32.gmra.mxu0 %v462
        %v795 = vpop.f32.mrf.mxu0
        %v796 = vadd.f32 0.0, %v795
        %v797 = vpop.f32.mrf.mxu0
        %v798 = vadd.f32 0.0, %v797
        %799 = vmatprep.mubr.f32.mxu0 0.0
        %800 = vmatmul.mubr.f32.gmra.mxu0 %v465
        %v801 = vpop.f32.mrf.mxu0
        %v802 = vadd.f32 0.0, %v801
        %v803 = vpop.f32.mrf.mxu0
        %v804 = vadd.f32 0.0, %v803
        %805 = vdwg.mxu0
        %806 = vmatprep.subr.mxu0 0.0
        %807 = vmatpush1.msra.mxu0 0.0
        %808 = vmatprep.subr.mxu0 0.0
        %809 = vmatpush1.msra.mxu0 0.0
        %810 = vmatprep.subr.mxu0 0.0
        %811 = vmatpush1.msra.mxu0 0.0
        %812 = vmatprep.subr.mxu0 0.0
        %813 = vmatpush1.msra.mxu0 0.0
        %814 = vmatprep.subr.mxu0 0.0
        %815 = vmatpush1.msra.mxu0 0.0
        %816 = vmatprep.subr.mxu0 0.0
        %817 = vmatpush1.msra.mxu0 0.0
        %818 = vmatprep.subr.mxu0 0.0
        %819 = vmatpush1.msra.mxu0 0.0
        %820 = vmatprep.subr.mxu0 0.0
        %821 = vmatpush1.msra.mxu0 0.0
        %822 = vmatprep.subr.mxu0 0.0
        %823 = vmatpush1.msra.mxu0 0.0
        %824 = vmatprep.subr.mxu0 0.0
        %825 = vmatpush1.msra.mxu0 0.0
        %826 = vmatprep.subr.mxu0 0.0
        %827 = vmatpush1.msra.mxu0 0.0
        %828 = vmatprep.subr.mxu0 0.0
        %829 = vmatpush1.msra.mxu0 0.0
        %830 = vmatprep.subr.mxu0 0.0
        %831 = vmatpush1.msra.mxu0 0.0
        %832 = vmatprep.subr.mxu0 0.0
        %833 = vmatpush1.msra.mxu0 0.0
        %834 = vmatprep.subr.mxu0 0.0
        %835 = vmatpush1.msra.mxu0 0.0
        %836 = vmatprep.subr.mxu0 %v441
        %837 = vmatpush1.msra.mxu0 %v440
        %838 = vmatprep.subr.mxu0 0.0
        %839 = vmatpush2.msra.mxu0 0.0
        %840 = vmatprep.subr.mxu0 0.0
        %841 = vmatpush2.msra.mxu0 0.0
        %842 = vmatprep.subr.mxu0 0.0
        %843 = vmatpush2.msra.mxu0 0.0
        %844 = vmatprep.subr.mxu0 0.0
        %845 = vmatpush2.msra.mxu0 0.0
        %846 = vmatprep.subr.mxu0 0.0
        %847 = vmatpush2.msra.mxu0 0.0
        %848 = vmatprep.subr.mxu0 0.0
        %849 = vmatpush2.msra.mxu0 0.0
        %850 = vmatprep.subr.mxu0 0.0
        %851 = vmatpush2.msra.mxu0 0.0
        %852 = vmatprep.subr.mxu0 0.0
        %853 = vmatpush2.msra.mxu0 0.0
        %854 = vmatprep.subr.mxu0 0.0
        %855 = vmatpush2.msra.mxu0 0.0
        %856 = vmatprep.subr.mxu0 0.0
        %857 = vmatpush2.msra.mxu0 0.0
        %858 = vmatprep.subr.mxu0 0.0
        %859 = vmatpush2.msra.mxu0 0.0
        %860 = vmatprep.subr.mxu0 0.0
        %861 = vmatpush2.msra.mxu0 0.0
        %862 = vmatprep.subr.mxu0 0.0
        %863 = vmatpush2.msra.mxu0 0.0
        %864 = vmatprep.subr.mxu0 0.0
        %865 = vmatpush2.msra.mxu0 0.0
        %866 = vmatprep.subr.mxu0 0.0
        %867 = vmatpush2.msra.mxu0 0.0
        %868 = vmatprep.subr.mxu0 0.0
        %869 = vmatpush2.msra.mxu0 0.0
        %870 = vmatprep.mubr.f32.mxu0 0.0
        %871 = vmatmul.mubr.f32.gmra.mxu0 %v444
        %v872 = vpop.f32.mrf.mxu0
        %v873 = vadd.f32 0.0, %v872
        %v874 = vpop.f32.mrf.mxu0
        %v875 = vadd.f32 0.0, %v874
        %876 = vmatprep.mubr.f32.mxu0 0.0
        %877 = vmatmul.mubr.f32.gmra.mxu0 %v447
        %v878 = vpop.f32.mrf.mxu0
        %v879 = vadd.f32 0.0, %v878
        %v880 = vpop.f32.mrf.mxu0
        %v881 = vadd.f32 0.0, %v880
        %882 = vmatprep.mubr.f32.mxu0 0.0
        %883 = vmatmul.mubr.f32.gmra.mxu0 %v450
        %v884 = vpop.f32.mrf.mxu0
        %v885 = vadd.f32 0.0, %v884
        %v886 = vpop.f32.mrf.mxu0
        %v887 = vadd.f32 0.0, %v886
        %888 = vmatprep.mubr.f32.mxu0 0.0
        %889 = vmatmul.mubr.f32.gmra.mxu0 %v453
        %v890 = vpop.f32.mrf.mxu0
        %v891 = vadd.f32 0.0, %v890
        %v892 = vpop.f32.mrf.mxu0
        %v893 = vadd.f32 0.0, %v892
        %894 = vmatprep.mubr.f32.mxu0 0.0
        %895 = vmatmul.mubr.f32.gmra.mxu0 %v456
        %v896 = vpop.f32.mrf.mxu0
        %v897 = vadd.f32 0.0, %v896
        %v898 = vpop.f32.mrf.mxu0
        %v899 = vadd.f32 0.0, %v898
        %900 = vmatprep.mubr.f32.mxu0 0.0
        %901 = vmatmul.mubr.f32.gmra.mxu0 %v459
        %v902 = vpop.f32.mrf.mxu0
        %v903 = vadd.f32 0.0, %v902
        %v904 = vpop.f32.mrf.mxu0
        %v905 = vadd.f32 0.0, %v904
        %906 = vmatprep.mubr.f32.mxu0 0.0
        %907 = vmatmul.mubr.f32.gmra.mxu0 %v462
        %v908 = vpop.f32.mrf.mxu0
        %v909 = vadd.f32 0.0, %v908
        %v910 = vpop.f32.mrf.mxu0
        %v911 = vadd.f32 0.0, %v910
        %912 = vmatprep.mubr.f32.mxu0 0.0
        %913 = vmatmul.mubr.f32.gmra.mxu0 %v465
        %v914 = vpop.f32.mrf.mxu0
        %v915 = vadd.f32 0.0, %v914
        %v916 = vpop.f32.mrf.mxu0
        %v917 = vadd.f32 0.0, %v916
        %918 = vdwg.mxu0
        %919 = vst [vmem:[#allocation2] sm:$0xff] %v534
        %920 = vst [vmem:[#allocation2 + $0x8] sm:$0xff] %v536
        %921 = vst [vmem:[#allocation2 + $0x10] sm:$0xff] %v647
        %922 = vst [vmem:[#allocation2 + $0x18] sm:$0xff] %v649
        %923 = vst [vmem:[#allocation2 + $0x20] sm:$0xff] %v760
        %924 = vst [vmem:[#allocation2 + $0x28] sm:$0xff] %v762
        %925 = vst [vmem:[#allocation2 + $0x30] sm:$0xff] %v873
        %926 = vst [vmem:[#allocation2 + $0x38] sm:$0xff] %v875
        %927 = vst [vmem:[#allocation2 + $0x40] sm:$0xff] %v540
        %928 = vst [vmem:[#allocation2 + $0x48] sm:$0xff] %v542
        %929 = vst [vmem:[#allocation2 + $0x50] sm:$0xff] %v653
        %930 = vst [vmem:[#allocation2 + $0x58] sm:$0xff] %v655
        %931 = vst [vmem:[#allocation2 + $0x60] sm:$0xff] %v766
        %932 = vst [vmem:[#allocation2 + $0x68] sm:$0xff] %v768
        %933 = vst [vmem:[#allocation2 + $0x70] sm:$0xff] %v879
        %934 = vst [vmem:[#allocation2 + $0x78] sm:$0xff] %v881
        %935 = vst [vmem:[#allocation2 + $0x80] sm:$0xff] %v546
        %936 = vst [vmem:[#allocation2 + $0x88] sm:$0xff] %v548
        %937 = vst [vmem:[#allocation2 + $0x90] sm:$0xff] %v659
        %938 = vst [vmem:[#allocation2 + $0x98] sm:$0xff] %v661
        %939 = vst [vmem:[#allocation2 + $0xa0] sm:$0xff] %v772
        %940 = vst [vmem:[#allocation2 + $0xa8] sm:$0xff] %v774
        %941 = vst [vmem:[#allocation2 + $0xb0] sm:$0xff] %v885
        %942 = vst [vmem:[#allocation2 + $0xb8] sm:$0xff] %v887
        %943 = vst [vmem:[#allocation2 + $0xc0] sm:$0xff] %v552
        %944 = vst [vmem:[#allocation2 + $0xc8] sm:$0xff] %v554
        %945 = vst [vmem:[#allocation2 + $0xd0] sm:$0xff] %v665
        %946 = vst [vmem:[#allocation2 + $0xd8] sm:$0xff] %v667
        %947 = vst [vmem:[#allocation2 + $0xe0] sm:$0xff] %v778
        %948 = vst [vmem:[#allocation2 + $0xe8] sm:$0xff] %v780
        %949 = vst [vmem:[#allocation2 + $0xf0] sm:$0xff] %v891
        %950 = vst [vmem:[#allocation2 + $0xf8] sm:$0xff] %v893
        %951 = vst [vmem:[#allocation3] sm:$0xff] %v558
        %952 = vst [vmem:[#allocation3 + $0x8] sm:$0xff] %v560
        %953 = vst [vmem:[#allocation3 + $0x10] sm:$0xff] %v671
        %954 = vst [vmem:[#allocation3 + $0x18] sm:$0xff] %v673
        %955 = vst [vmem:[#allocation3 + $0x20] sm:$0xff] %v784
        %956 = vst [vmem:[#allocation3 + $0x28] sm:$0xff] %v786
        %957 = vst [vmem:[#allocation3 + $0x30] sm:$0xff] %v897
        %958 = vst [vmem:[#allocation3 + $0x38] sm:$0xff] %v899
        %959 = vst [vmem:[#allocation3 + $0x40] sm:$0xff] %v564
        %960 = vst [vmem:[#allocation3 + $0x48] sm:$0xff] %v566
        %961 = vst [vmem:[#allocation3 + $0x50] sm:$0xff] %v677
        %962 = vst [vmem:[#allocation3 + $0x58] sm:$0xff] %v679
        %963 = vst [vmem:[#allocation3 + $0x60] sm:$0xff] %v790
        %964 = vst [vmem:[#allocation3 + $0x68] sm:$0xff] %v792
        %965 = vst [vmem:[#allocation3 + $0x70] sm:$0xff] %v903
        %966 = vst [vmem:[#allocation3 + $0x78] sm:$0xff] %v905
        %967 = vst [vmem:[#allocation3 + $0x80] sm:$0xff] %v570
        %968 = vst [vmem:[#allocation3 + $0x88] sm:$0xff] %v572
        %969 = vst [vmem:[#allocation3 + $0x90] sm:$0xff] %v683
        %970 = vst [vmem:[#allocation3 + $0x98] sm:$0xff] %v685
        %971 = vst [vmem:[#allocation3 + $0xa0] sm:$0xff] %v796
        %972 = vst [vmem:[#allocation3 + $0xa8] sm:$0xff] %v798
        %973 = vst [vmem:[#allocation3 + $0xb0] sm:$0xff] %v909
        %974 = vst [vmem:[#allocation3 + $0xb8] sm:$0xff] %v911
        %975 = vst [vmem:[#allocation3 + $0xc0] sm:$0xff] %v576
        %976 = vst [vmem:[#allocation3 + $0xc8] sm:$0xff] %v578
        %977 = vst [vmem:[#allocation3 + $0xd0] sm:$0xff] %v689
        %978 = vst [vmem:[#allocation3 + $0xd8] sm:$0xff] %v691
        %979 = vst [vmem:[#allocation3 + $0xe0] sm:$0xff] %v802
        %980 = vst [vmem:[#allocation3 + $0xe8] sm:$0xff] %v804
        %981 = vst [vmem:[#allocation3 + $0xf0] sm:$0xff] %v915
        %982 = vst [vmem:[#allocation3 + $0xf8] sm:$0xff] %v917
      $region52: #{tpu_custom_call.1} parent=47 // pred_fallthru
        _
      %v983 = vld [vmem:[%s361] sm:$0xff]
      %v984 = vld [vmem:[%s2] sm:$0xff]
      %v985 = vld [vmem:[%s2 + $0x8] sm:$0xff]
      %v986 = vld [vmem:[%s2 + $0x10] sm:$0xff]
      %v987 = vld [vmem:[%s2 + $0x18] sm:$0xff]
      %vm988 = vcmask 64512
      %v990 = vsel %vm988, %v984, 0
      %v993 = vsel %vm988, %v985, 0
      %v996 = vsel %vm988, %v986, 0
      %v999 = vsel %vm988, %v987, 0
      %1001 = vmatprep.subr.mxu0 0.0
      %1002 = vmatpush1.msra.mxu0 0.0
      %1003 = vmatprep.subr.mxu0 0.0
      %1004 = vmatpush1.msra.mxu0 0.0
      %1005 = vmatprep.subr.mxu0 0.0
      %1006 = vmatpush1.msra.mxu0 0.0
      %1007 = vmatprep.subr.mxu0 0.0
      %1008 = vmatpush1.msra.mxu0 0.0
      %1009 = vmatprep.subr.mxu0 0.0
      %1010 = vmatpush1.msra.mxu0 0.0
      %1011 = vmatprep.subr.mxu0 0.0
      %1012 = vmatpush1.msra.mxu0 0.0
      %1013 = vmatprep.subr.mxu0 0.0
      %1014 = vmatpush1.msra.mxu0 0.0
      %1015 = vmatprep.subr.mxu0 0.0
      %1016 = vmatpush1.msra.mxu0 0.0
      %1017 = vmatprep.subr.mxu0 0.0
      %1018 = vmatpush1.msra.mxu0 0.0
      %1019 = vmatprep.subr.mxu0 0.0
      %1020 = vmatpush1.msra.mxu0 0.0
      %1021 = vmatprep.subr.mxu0 0.0
      %1022 = vmatpush1.msra.mxu0 0.0
      %1023 = vmatprep.subr.mxu0 0.0
      %1024 = vmatpush1.msra.mxu0 0.0
      %1025 = vmatprep.subr.mxu0 0.0
      %1026 = vmatpush1.msra.mxu0 0.0
      %1027 = vmatprep.subr.mxu0 0.0
      %1028 = vmatpush1.msra.mxu0 0.0
      %1029 = vmatprep.subr.mxu0 0.0
      %1030 = vmatpush1.msra.mxu0 0.0
      %1031 = vmatprep.subr.mxu0 0.0
      %1032 = vmatpush1.msra.mxu0 %v983
      %1033 = vmatprep.subr.mxu0 0.0
      %1034 = vmatpush2.msra.mxu0 0.0
      %1035 = vmatprep.subr.mxu0 0.0
      %1036 = vmatpush2.msra.mxu0 0.0
      %1037 = vmatprep.subr.mxu0 0.0
      %1038 = vmatpush2.msra.mxu0 0.0
      %1039 = vmatprep.subr.mxu0 0.0
      %1040 = vmatpush2.msra.mxu0 0.0
      %1041 = vmatprep.subr.mxu0 0.0
      %1042 = vmatpush2.msra.mxu0 0.0
      %1043 = vmatprep.subr.mxu0 0.0
      %1044 = vmatpush2.msra.mxu0 0.0
      %1045 = vmatprep.subr.mxu0 0.0
      %1046 = vmatpush2.msra.mxu0 0.0
      %1047 = vmatprep.subr.mxu0 0.0
      %1048 = vmatpush2.msra.mxu0 0.0
      %1049 = vmatprep.subr.mxu0 0.0
      %1050 = vmatpush2.msra.mxu0 0.0
      %1051 = vmatprep.subr.mxu0 0.0
      %1052 = vmatpush2.msra.mxu0 0.0
      %1053 = vmatprep.subr.mxu0 0.0
      %1054 = vmatpush2.msra.mxu0 0.0
      %1055 = vmatprep.subr.mxu0 0.0
      %1056 = vmatpush2.msra.mxu0 0.0
      %1057 = vmatprep.subr.mxu0 0.0
      %1058 = vmatpush2.msra.mxu0 0.0
      %1059 = vmatprep.subr.mxu0 0.0
      %1060 = vmatpush2.msra.mxu0 0.0
      %1061 = vmatprep.subr.mxu0 0.0
      %1062 = vmatpush2.msra.mxu0 0.0
      %1063 = vmatprep.subr.mxu0 0.0
      %1064 = vmatpush2.msra.mxu0 0.0
      %1065 = vmatprep.mubr.f32.mxu0 0.0
      %1066 = vmatmul.mubr.f32.gmra.mxu0 %v990
      %v1067 = vpop.f32.mrf.mxu0
      %v1068 = vadd.f32 0.0, %v1067
      %v1069 = vpop.f32.mrf.mxu0
      %1070 = vmatprep.mubr.f32.mxu0 0.0
      %1071 = vmatmul.mubr.f32.gmra.mxu0 %v993
      %v1072 = vpop.f32.mrf.mxu0
      %v1073 = vadd.f32 0.0, %v1072
      %v1074 = vpop.f32.mrf.mxu0
      %1075 = vmatprep.mubr.f32.mxu0 0.0
      %1076 = vmatmul.mubr.f32.gmra.mxu0 %v996
      %v1077 = vpop.f32.mrf.mxu0
      %v1078 = vadd.f32 0.0, %v1077
      %v1079 = vpop.f32.mrf.mxu0
      %1080 = vmatprep.mubr.f32.mxu0 0.0
      %1081 = vmatmul.mubr.f32.gmra.mxu0 %v999
      %v1082 = vpop.f32.mrf.mxu0
      %v1083 = vadd.f32 0.0, %v1082
      %v1084 = vpop.f32.mrf.mxu0
      %1085 = vdwg.mxu0
      %v1086 = vld [vmem:[#allocation2] sm:$0xff]
      %v1087 = vld [vmem:[#allocation2 + $0x8] sm:$0xff]
      %v1088 = vld [vmem:[#allocation2 + $0x10] sm:$0xff]
      %v1089 = vld [vmem:[#allocation2 + $0x18] sm:$0xff]
      %v1090 = vld [vmem:[#allocation2 + $0x20] sm:$0xff]
      %v1091 = vld [vmem:[#allocation2 + $0x28] sm:$0xff]
      %v1092 = vld [vmem:[#allocation2 + $0x30] sm:$0xff]
      %v1093 = vld [vmem:[#allocation2 + $0x38] sm:$0xff]
      %v1094 = vld [vmem:[#allocation2 + $0x40] sm:$0xff]
      %v1095 = vld [vmem:[#allocation2 + $0x48] sm:$0xff]
      %v1096 = vld [vmem:[#allocation2 + $0x50] sm:$0xff]
      %v1097 = vld [vmem:[#allocation2 + $0x58] sm:$0xff]
      %v1098 = vld [vmem:[#allocation2 + $0x60] sm:$0xff]
      %v1099 = vld [vmem:[#allocation2 + $0x68] sm:$0xff]
      %v1100 = vld [vmem:[#allocation2 + $0x70] sm:$0xff]
      %v1101 = vld [vmem:[#allocation2 + $0x78] sm:$0xff]
      %v1102 = vld [vmem:[#allocation2 + $0x80] sm:$0xff]
      %v1103 = vld [vmem:[#allocation2 + $0x88] sm:$0xff]
      %v1104 = vld [vmem:[#allocation2 + $0x90] sm:$0xff]
      %v1105 = vld [vmem:[#allocation2 + $0x98] sm:$0xff]
      %v1106 = vld [vmem:[#allocation2 + $0xa0] sm:$0xff]
      %v1107 = vld [vmem:[#allocation2 + $0xa8] sm:$0xff]
      %v1108 = vld [vmem:[#allocation2 + $0xb0] sm:$0xff]
      %v1109 = vld [vmem:[#allocation2 + $0xb8] sm:$0xff]
      %v1110 = vld [vmem:[#allocation2 + $0xc0] sm:$0xff]
      %v1111 = vld [vmem:[#allocation2 + $0xc8] sm:$0xff]
      %v1112 = vld [vmem:[#allocation2 + $0xd0] sm:$0xff]
      %v1113 = vld [vmem:[#allocation2 + $0xd8] sm:$0xff]
      %v1114 = vld [vmem:[#allocation2 + $0xe0] sm:$0xff]
      %v1115 = vld [vmem:[#allocation2 + $0xe8] sm:$0xff]
      %v1116 = vld [vmem:[#allocation2 + $0xf0] sm:$0xff]
      %v1117 = vld [vmem:[#allocation2 + $0xf8] sm:$0xff]
      %v1118 = vadd.f32 %v1086, %v1068
      %v1119 = vadd.f32 %v1087, %v1068
      %v1120 = vadd.f32 %v1088, %v1068
      %v1121 = vadd.f32 %v1089, %v1068
      %v1122 = vadd.f32 %v1090, %v1068
      %v1123 = vadd.f32 %v1091, %v1068
      %v1124 = vadd.f32 %v1092, %v1068
      %v1125 = vadd.f32 %v1093, %v1068
      %v1126 = vadd.f32 %v1094, %v1073
      %v1127 = vadd.f32 %v1095, %v1073
      %v1128 = vadd.f32 %v1096, %v1073
      %v1129 = vadd.f32 %v1097, %v1073
      %v1130 = vadd.f32 %v1098, %v1073
      %v1131 = vadd.f32 %v1099, %v1073
      %v1132 = vadd.f32 %v1100, %v1073
      %v1133 = vadd.f32 %v1101, %v1073
      %v1134 = vadd.f32 %v1102, %v1078
      %v1135 = vadd.f32 %v1103, %v1078
      %v1136 = vadd.f32 %v1104, %v1078
      %v1137 = vadd.f32 %v1105, %v1078
      %v1138 = vadd.f32 %v1106, %v1078
      %v1139 = vadd.f32 %v1107, %v1078
      %v1140 = vadd.f32 %v1108, %v1078
      %v1141 = vadd.f32 %v1109, %v1078
      %v1142 = vadd.f32 %v1110, %v1083
      %v1143 = vadd.f32 %v1111, %v1083
      %v1144 = vadd.f32 %v1112, %v1083
      %v1145 = vadd.f32 %v1113, %v1083
      %v1146 = vadd.f32 %v1114, %v1083
      %v1147 = vadd.f32 %v1115, %v1083
      %v1148 = vadd.f32 %v1116, %v1083
      %v1149 = vadd.f32 %v1117, %v1083
      %v1150 = vmax.f32 %v1118, 0.0
      %v1151 = vmax.f32 %v1119, 0.0
      %v1152 = vmax.f32 %v1120, 0.0
      %v1153 = vmax.f32 %v1121, 0.0
      %v1154 = vmax.f32 %v1122, 0.0
      %v1155 = vmax.f32 %v1123, 0.0
      %v1156 = vmax.f32 %v1124, 0.0
      %v1157 = vmax.f32 %v1125, 0.0
      %v1158 = vmax.f32 %v1126, 0.0
      %v1159 = vmax.f32 %v1127, 0.0
      %v1160 = vmax.f32 %v1128, 0.0
      %v1161 = vmax.f32 %v1129, 0.0
      %v1162 = vmax.f32 %v1130, 0.0
      %v1163 = vmax.f32 %v1131, 0.0
      %v1164 = vmax.f32 %v1132, 0.0
      %v1165 = vmax.f32 %v1133, 0.0
      %v1166 = vmax.f32 %v1134, 0.0
      %v1167 = vmax.f32 %v1135, 0.0
      %v1168 = vmax.f32 %v1136, 0.0
      %v1169 = vmax.f32 %v1137, 0.0
      %v1170 = vmax.f32 %v1138, 0.0
      %v1171 = vmax.f32 %v1139, 0.0
      %v1172 = vmax.f32 %v1140, 0.0
      %v1173 = vmax.f32 %v1141, 0.0
      %v1174 = vmax.f32 %v1142, 0.0
      %v1175 = vmax.f32 %v1143, 0.0
      %v1176 = vmax.f32 %v1144, 0.0
      %v1177 = vmax.f32 %v1145, 0.0
      %v1178 = vmax.f32 %v1146, 0.0
      %v1179 = vmax.f32 %v1147, 0.0
      %v1180 = vmax.f32 %v1148, 0.0
      %v1181 = vmax.f32 %v1149, 0.0
      %v1182 = vld [vmem:[%s3] sm:$0xff]
      %v1183 = vld [vmem:[%s3 + $0x8] sm:$0xff]
      %v1184 = vld [vmem:[%s3 + $0x10] sm:$0xff]
      %v1185 = vld [vmem:[%s3 + $0x18] sm:$0xff]
      %v1186 = vld [vmem:[%s4] sm:$0xff]
      %v1187 = vld [vmem:[%s4 + $0x8] sm:$0xff]
      %v1188 = vld [vmem:[%s4 + $0x10] sm:$0xff]
      %v1189 = vld [vmem:[%s4 + $0x18] sm:$0xff]
      %1191 = vset.pattern.permute.xlu0 0
      %1192 = vperm.xlu0 %1191, %v1186
      %v1193 = vpop.permute.xlu0 %1192
      %1196 = vset.pattern.permute.xlu0 0
      %1197 = vperm.xlu0 %1196, %v1187
      %v1198 = vpop.permute.xlu0 %1197
      %1201 = vset.pattern.permute.xlu0 0
      %1202 = vperm.xlu0 %1201, %v1188
      %v1203 = vpop.permute.xlu0 %1202
      %1206 = vset.pattern.permute.xlu0 0
      %1207 = vperm.xlu0 %1206, %v1189
      %v1208 = vpop.permute.xlu0 %1207
      %vm1210 = vcmask 261120
      %v1212 = vsel %vm1210, %v1182, 0
      %v1215 = vsel %vm1210, %v1183, 0
      %v1218 = vsel %vm1210, %v1184, 0
      %v1221 = vsel %vm1210, %v1185, 0
      %1223 = vmatprep.subr.mxu0 0.0
      %1224 = vmatpush1.msra.mxu0 0.0
      %1225 = vmatprep.subr.mxu0 0.0
      %1226 = vmatpush1.msra.mxu0 0.0
      %1227 = vmatprep.subr.mxu0 0.0
      %1228 = vmatpush1.msra.mxu0 0.0
      %1229 = vmatprep.subr.mxu0 0.0
      %1230 = vmatpush1.msra.mxu0 0.0
      %1231 = vmatprep.subr.mxu0 0.0
      %1232 = vmatpush1.msra.mxu0 0.0
      %1233 = vmatprep.subr.mxu0 0.0
      %1234 = vmatpush1.msra.mxu0 0.0
      %1235 = vmatprep.subr.mxu0 0.0
      %1236 = vmatpush1.msra.mxu0 0.0
      %1237 = vmatprep.subr.mxu0 0.0
      %1238 = vmatpush1.msra.mxu0 0.0
      %1239 = vmatprep.subr.mxu0 0.0
      %1240 = vmatpush1.msra.mxu0 0.0
      %1241 = vmatprep.subr.mxu0 0.0
      %1242 = vmatpush1.msra.mxu0 0.0
      %1243 = vmatprep.subr.mxu0 0.0
      %1244 = vmatpush1.msra.mxu0 0.0
      %1245 = vmatprep.subr.mxu0 0.0
      %1246 = vmatpush1.msra.mxu0 0.0
      %1247 = vmatprep.subr.mxu0 %v1175
      %1248 = vmatpush1.msra.mxu0 %v1174
      %1249 = vmatprep.subr.mxu0 %v1167
      %1250 = vmatpush1.msra.mxu0 %v1166
      %1251 = vmatprep.subr.mxu0 %v1159
      %1252 = vmatpush1.msra.mxu0 %v1158
      %1253 = vmatprep.subr.mxu0 %v1151
      %1254 = vmatpush1.msra.mxu0 %v1150
      %1255 = vmatprep.subr.mxu0 0.0
      %1256 = vmatpush2.msra.mxu0 0.0
      %1257 = vmatprep.subr.mxu0 0.0
      %1258 = vmatpush2.msra.mxu0 0.0
      %1259 = vmatprep.subr.mxu0 0.0
      %1260 = vmatpush2.msra.mxu0 0.0
      %1261 = vmatprep.subr.mxu0 0.0
      %1262 = vmatpush2.msra.mxu0 0.0
      %1263 = vmatprep.subr.mxu0 0.0
      %1264 = vmatpush2.msra.mxu0 0.0
      %1265 = vmatprep.subr.mxu0 0.0
      %1266 = vmatpush2.msra.mxu0 0.0
      %1267 = vmatprep.subr.mxu0 0.0
      %1268 = vmatpush2.msra.mxu0 0.0
      %1269 = vmatprep.subr.mxu0 0.0
      %1270 = vmatpush2.msra.mxu0 0.0
      %1271 = vmatprep.subr.mxu0 0.0
      %1272 = vmatpush2.msra.mxu0 0.0
      %1273 = vmatprep.subr.mxu0 0.0
      %1274 = vmatpush2.msra.mxu0 0.0
      %1275 = vmatprep.subr.mxu0 0.0
      %1276 = vmatpush2.msra.mxu0 0.0
      %1277 = vmatprep.subr.mxu0 0.0
      %1278 = vmatpush2.msra.mxu0 0.0
      %1279 = vmatprep.subr.mxu0 0.0
      %1280 = vmatpush2.msra.mxu0 0.0
      %1281 = vmatprep.subr.mxu0 0.0
      %1282 = vmatpush2.msra.mxu0 0.0
      %1283 = vmatprep.subr.mxu0 0.0
      %1284 = vmatpush2.msra.mxu0 0.0
      %1285 = vmatprep.subr.mxu0 0.0
      %1286 = vmatpush2.msra.mxu0 0.0
      %1287 = vmatprep.mubr.f32.mxu0 0.0
      %1288 = vmatmul.mubr.f32.gmra.mxu0 %v1212
      %v1289 = vpop.f32.mrf.mxu0
      %v1290 = vadd.f32 %v1193, %v1289
      %v1291 = vpop.f32.mrf.mxu0
      %v1292 = vadd.f32 %v1193, %v1291
      %1293 = vmatprep.mubr.f32.mxu0 0.0
      %1294 = vmatmul.mubr.f32.gmra.mxu0 %v1215
      %v1295 = vpop.f32.mrf.mxu0
      %v1296 = vadd.f32 %v1198, %v1295
      %v1297 = vpop.f32.mrf.mxu0
      %v1298 = vadd.f32 %v1198, %v1297
      %1299 = vmatprep.mubr.f32.mxu0 0.0
      %1300 = vmatmul.mubr.f32.gmra.mxu0 %v1218
      %v1301 = vpop.f32.mrf.mxu0
      %v1302 = vadd.f32 %v1203, %v1301
      %v1303 = vpop.f32.mrf.mxu0
      %v1304 = vadd.f32 %v1203, %v1303
      %1305 = vmatprep.mubr.f32.mxu0 0.0
      %1306 = vmatmul.mubr.f32.gmra.mxu0 %v1221
      %v1307 = vpop.f32.mrf.mxu0
      %v1308 = vadd.f32 %v1208, %v1307
      %v1309 = vpop.f32.mrf.mxu0
      %v1310 = vadd.f32 %v1208, %v1309
      %1311 = vdwg.mxu0
      %1312 = vmatprep.subr.mxu0 0.0
      %1313 = vmatpush1.msra.mxu0 0.0
      %1314 = vmatprep.subr.mxu0 0.0
      %1315 = vmatpush1.msra.mxu0 0.0
      %1316 = vmatprep.subr.mxu0 0.0
      %1317 = vmatpush1.msra.mxu0 0.0
      %1318 = vmatprep.subr.mxu0 0.0
      %1319 = vmatpush1.msra.mxu0 0.0
      %1320 = vmatprep.subr.mxu0 0.0
      %1321 = vmatpush1.msra.mxu0 0.0
      %1322 = vmatprep.subr.mxu0 0.0
      %1323 = vmatpush1.msra.mxu0 0.0
      %1324 = vmatprep.subr.mxu0 0.0
      %1325 = vmatpush1.msra.mxu0 0.0
      %1326 = vmatprep.subr.mxu0 0.0
      %1327 = vmatpush1.msra.mxu0 0.0
      %1328 = vmatprep.subr.mxu0 0.0
      %1329 = vmatpush1.msra.mxu0 0.0
      %1330 = vmatprep.subr.mxu0 0.0
      %1331 = vmatpush1.msra.mxu0 0.0
      %1332 = vmatprep.subr.mxu0 0.0
      %1333 = vmatpush1.msra.mxu0 0.0
      %1334 = vmatprep.subr.mxu0 0.0
      %1335 = vmatpush1.msra.mxu0 0.0
      %1336 = vmatprep.subr.mxu0 %v1177
      %1337 = vmatpush1.msra.mxu0 %v1176
      %1338 = vmatprep.subr.mxu0 %v1169
      %1339 = vmatpush1.msra.mxu0 %v1168
      %1340 = vmatprep.subr.mxu0 %v1161
      %1341 = vmatpush1.msra.mxu0 %v1160
      %1342 = vmatprep.subr.mxu0 %v1153
      %1343 = vmatpush1.msra.mxu0 %v1152
      %1344 = vmatprep.subr.mxu0 0.0
      %1345 = vmatpush2.msra.mxu0 0.0
      %1346 = vmatprep.subr.mxu0 0.0
      %1347 = vmatpush2.msra.mxu0 0.0
      %1348 = vmatprep.subr.mxu0 0.0
      %1349 = vmatpush2.msra.mxu0 0.0
      %1350 = vmatprep.subr.mxu0 0.0
      %1351 = vmatpush2.msra.mxu0 0.0
      %1352 = vmatprep.subr.mxu0 0.0
      %1353 = vmatpush2.msra.mxu0 0.0
      %1354 = vmatprep.subr.mxu0 0.0
      %1355 = vmatpush2.msra.mxu0 0.0
      %1356 = vmatprep.subr.mxu0 0.0
      %1357 = vmatpush2.msra.mxu0 0.0
      %1358 = vmatprep.subr.mxu0 0.0
      %1359 = vmatpush2.msra.mxu0 0.0
      %1360 = vmatprep.subr.mxu0 0.0
      %1361 = vmatpush2.msra.mxu0 0.0
      %1362 = vmatprep.subr.mxu0 0.0
      %1363 = vmatpush2.msra.mxu0 0.0
      %1364 = vmatprep.subr.mxu0 0.0
      %1365 = vmatpush2.msra.mxu0 0.0
      %1366 = vmatprep.subr.mxu0 0.0
      %1367 = vmatpush2.msra.mxu0 0.0
      %1368 = vmatprep.subr.mxu0 0.0
      %1369 = vmatpush2.msra.mxu0 0.0
      %1370 = vmatprep.subr.mxu0 0.0
      %1371 = vmatpush2.msra.mxu0 0.0
      %1372 = vmatprep.subr.mxu0 0.0
      %1373 = vmatpush2.msra.mxu0 0.0
      %1374 = vmatprep.subr.mxu0 0.0
      %1375 = vmatpush2.msra.mxu0 0.0
      %1376 = vmatprep.mubr.f32.mxu0 0.0
      %1377 = vmatmul.mubr.f32.gmra.mxu0 %v1212
      %v1378 = vpop.f32.mrf.mxu0
      %v1379 = vadd.f32 %v1193, %v1378
      %v1380 = vpop.f32.mrf.mxu0
      %v1381 = vadd.f32 %v1193, %v1380
      %1382 = vmatprep.mubr.f32.mxu0 0.0
      %1383 = vmatmul.mubr.f32.gmra.mxu0 %v1215
      %v1384 = vpop.f32.mrf.mxu0
      %v1385 = vadd.f32 %v1198, %v1384
      %v1386 = vpop.f32.mrf.mxu0
      %v1387 = vadd.f32 %v1198, %v1386
      %1388 = vmatprep.mubr.f32.mxu0 0.0
      %1389 = vmatmul.mubr.f32.gmra.mxu0 %v1218
      %v1390 = vpop.f32.mrf.mxu0
      %v1391 = vadd.f32 %v1203, %v1390
      %v1392 = vpop.f32.mrf.mxu0
      %v1393 = vadd.f32 %v1203, %v1392
      %1394 = vmatprep.mubr.f32.mxu0 0.0
      %1395 = vmatmul.mubr.f32.gmra.mxu0 %v1221
      %v1396 = vpop.f32.mrf.mxu0
      %v1397 = vadd.f32 %v1208, %v1396
      %v1398 = vpop.f32.mrf.mxu0
      %v1399 = vadd.f32 %v1208, %v1398
      %1400 = vdwg.mxu0
      %1401 = vmatprep.subr.mxu0 0.0
      %1402 = vmatpush1.msra.mxu0 0.0
      %1403 = vmatprep.subr.mxu0 0.0
      %1404 = vmatpush1.msra.mxu0 0.0
      %1405 = vmatprep.subr.mxu0 0.0
      %1406 = vmatpush1.msra.mxu0 0.0
      %1407 = vmatprep.subr.mxu0 0.0
      %1408 = vmatpush1.msra.mxu0 0.0
      %1409 = vmatprep.subr.mxu0 0.0
      %1410 = vmatpush1.msra.mxu0 0.0
      %1411 = vmatprep.subr.mxu0 0.0
      %1412 = vmatpush1.msra.mxu0 0.0
      %1413 = vmatprep.subr.mxu0 0.0
      %1414 = vmatpush1.msra.mxu0 0.0
      %1415 = vmatprep.subr.mxu0 0.0
      %1416 = vmatpush1.msra.mxu0 0.0
      %1417 = vmatprep.subr.mxu0 0.0
      %1418 = vmatpush1.msra.mxu0 0.0
      %1419 = vmatprep.subr.mxu0 0.0
      %1420 = vmatpush1.msra.mxu0 0.0
      %1421 = vmatprep.subr.mxu0 0.0
      %1422 = vmatpush1.msra.mxu0 0.0
      %1423 = vmatprep.subr.mxu0 0.0
      %1424 = vmatpush1.msra.mxu0 0.0
      %1425 = vmatprep.subr.mxu0 %v1179
      %1426 = vmatpush1.msra.mxu0 %v1178
      %1427 = vmatprep.subr.mxu0 %v1171
      %1428 = vmatpush1.msra.mxu0 %v1170
      %1429 = vmatprep.subr.mxu0 %v1163
      %1430 = vmatpush1.msra.mxu0 %v1162
      %1431 = vmatprep.subr.mxu0 %v1155
      %1432 = vmatpush1.msra.mxu0 %v1154
      %1433 = vmatprep.subr.mxu0 0.0
      %1434 = vmatpush2.msra.mxu0 0.0
      %1435 = vmatprep.subr.mxu0 0.0
      %1436 = vmatpush2.msra.mxu0 0.0
      %1437 = vmatprep.subr.mxu0 0.0
      %1438 = vmatpush2.msra.mxu0 0.0
      %1439 = vmatprep.subr.mxu0 0.0
      %1440 = vmatpush2.msra.mxu0 0.0
      %1441 = vmatprep.subr.mxu0 0.0
      %1442 = vmatpush2.msra.mxu0 0.0
      %1443 = vmatprep.subr.mxu0 0.0
      %1444 = vmatpush2.msra.mxu0 0.0
      %1445 = vmatprep.subr.mxu0 0.0
      %1446 = vmatpush2.msra.mxu0 0.0
      %1447 = vmatprep.subr.mxu0 0.0
      %1448 = vmatpush2.msra.mxu0 0.0
      %1449 = vmatprep.subr.mxu0 0.0
      %1450 = vmatpush2.msra.mxu0 0.0
      %1451 = vmatprep.subr.mxu0 0.0
      %1452 = vmatpush2.msra.mxu0 0.0
      %1453 = vmatprep.subr.mxu0 0.0
      %1454 = vmatpush2.msra.mxu0 0.0
      %1455 = vmatprep.subr.mxu0 0.0
      %1456 = vmatpush2.msra.mxu0 0.0
      %1457 = vmatprep.subr.mxu0 0.0
      %1458 = vmatpush2.msra.mxu0 0.0
      %1459 = vmatprep.subr.mxu0 0.0
      %1460 = vmatpush2.msra.mxu0 0.0
      %1461 = vmatprep.subr.mxu0 0.0
      %1462 = vmatpush2.msra.mxu0 0.0
      %1463 = vmatprep.subr.mxu0 0.0
      %1464 = vmatpush2.msra.mxu0 0.0
      %1465 = vmatprep.mubr.f32.mxu0 0.0
      %1466 = vmatmul.mubr.f32.gmra.mxu0 %v1212
      %v1467 = vpop.f32.mrf.mxu0
      %v1468 = vadd.f32 %v1193, %v1467
      %v1469 = vpop.f32.mrf.mxu0
      %v1470 = vadd.f32 %v1193, %v1469
      %1471 = vmatprep.mubr.f32.mxu0 0.0
      %1472 = vmatmul.mubr.f32.gmra.mxu0 %v1215
      %v1473 = vpop.f32.mrf.mxu0
      %v1474 = vadd.f32 %v1198, %v1473
      %v1475 = vpop.f32.mrf.mxu0
      %v1476 = vadd.f32 %v1198, %v1475
      %1477 = vmatprep.mubr.f32.mxu0 0.0
      %1478 = vmatmul.mubr.f32.gmra.mxu0 %v1218
      %v1479 = vpop.f32.mrf.mxu0
      %v1480 = vadd.f32 %v1203, %v1479
      %v1481 = vpop.f32.mrf.mxu0
      %v1482 = vadd.f32 %v1203, %v1481
      %1483 = vmatprep.mubr.f32.mxu0 0.0
      %1484 = vmatmul.mubr.f32.gmra.mxu0 %v1221
      %v1485 = vpop.f32.mrf.mxu0
      %v1486 = vadd.f32 %v1208, %v1485
      %v1487 = vpop.f32.mrf.mxu0
      %v1488 = vadd.f32 %v1208, %v1487
      %1489 = vdwg.mxu0
      %1490 = vmatprep.subr.mxu0 0.0
      %1491 = vmatpush1.msra.mxu0 0.0
      %1492 = vmatprep.subr.mxu0 0.0
      %1493 = vmatpush1.msra.mxu0 0.0
      %1494 = vmatprep.subr.mxu0 0.0
      %1495 = vmatpush1.msra.mxu0 0.0
      %1496 = vmatprep.subr.mxu0 0.0
      %1497 = vmatpush1.msra.mxu0 0.0
      %1498 = vmatprep.subr.mxu0 0.0
      %1499 = vmatpush1.msra.mxu0 0.0
      %1500 = vmatprep.subr.mxu0 0.0
      %1501 = vmatpush1.msra.mxu0 0.0
      %1502 = vmatprep.subr.mxu0 0.0
      %1503 = vmatpush1.msra.mxu0 0.0
      %1504 = vmatprep.subr.mxu0 0.0
      %1505 = vmatpush1.msra.mxu0 0.0
      %1506 = vmatprep.subr.mxu0 0.0
      %1507 = vmatpush1.msra.mxu0 0.0
      %1508 = vmatprep.subr.mxu0 0.0
      %1509 = vmatpush1.msra.mxu0 0.0
      %1510 = vmatprep.subr.mxu0 0.0
      %1511 = vmatpush1.msra.mxu0 0.0
      %1512 = vmatprep.subr.mxu0 0.0
      %1513 = vmatpush1.msra.mxu0 0.0
      %1514 = vmatprep.subr.mxu0 %v1181
      %1515 = vmatpush1.msra.mxu0 %v1180
      %1516 = vmatprep.subr.mxu0 %v1173
      %1517 = vmatpush1.msra.mxu0 %v1172
      %1518 = vmatprep.subr.mxu0 %v1165
      %1519 = vmatpush1.msra.mxu0 %v1164
      %1520 = vmatprep.subr.mxu0 %v1157
      %1521 = vmatpush1.msra.mxu0 %v1156
      %1522 = vmatprep.subr.mxu0 0.0
      %1523 = vmatpush2.msra.mxu0 0.0
      %1524 = vmatprep.subr.mxu0 0.0
      %1525 = vmatpush2.msra.mxu0 0.0
      %1526 = vmatprep.subr.mxu0 0.0
      %1527 = vmatpush2.msra.mxu0 0.0
      %1528 = vmatprep.subr.mxu0 0.0
      %1529 = vmatpush2.msra.mxu0 0.0
      %1530 = vmatprep.subr.mxu0 0.0
      %1531 = vmatpush2.msra.mxu0 0.0
      %1532 = vmatprep.subr.mxu0 0.0
      %1533 = vmatpush2.msra.mxu0 0.0
      %1534 = vmatprep.subr.mxu0 0.0
      %1535 = vmatpush2.msra.mxu0 0.0
      %1536 = vmatprep.subr.mxu0 0.0
      %1537 = vmatpush2.msra.mxu0 0.0
      %1538 = vmatprep.subr.mxu0 0.0
      %1539 = vmatpush2.msra.mxu0 0.0
      %1540 = vmatprep.subr.mxu0 0.0
      %1541 = vmatpush2.msra.mxu0 0.0
      %1542 = vmatprep.subr.mxu0 0.0
      %1543 = vmatpush2.msra.mxu0 0.0
      %1544 = vmatprep.subr.mxu0 0.0
      %1545 = vmatpush2.msra.mxu0 0.0
      %1546 = vmatprep.subr.mxu0 0.0
      %1547 = vmatpush2.msra.mxu0 0.0
      %1548 = vmatprep.subr.mxu0 0.0
      %1549 = vmatpush2.msra.mxu0 0.0
      %1550 = vmatprep.subr.mxu0 0.0
      %1551 = vmatpush2.msra.mxu0 0.0
      %1552 = vmatprep.subr.mxu0 0.0
      %1553 = vmatpush2.msra.mxu0 0.0
      %1554 = vmatprep.mubr.f32.mxu0 0.0
      %1555 = vmatmul.mubr.f32.gmra.mxu0 %v1212
      %v1556 = vpop.f32.mrf.mxu0
      %v1557 = vadd.f32 %v1193, %v1556
      %v1558 = vpop.f32.mrf.mxu0
      %v1559 = vadd.f32 %v1193, %v1558
      %1560 = vmatprep.mubr.f32.mxu0 0.0
      %1561 = vmatmul.mubr.f32.gmra.mxu0 %v1215
      %v1562 = vpop.f32.mrf.mxu0
      %v1563 = vadd.f32 %v1198, %v1562
      %v1564 = vpop.f32.mrf.mxu0
      %v1565 = vadd.f32 %v1198, %v1564
      %1566 = vmatprep.mubr.f32.mxu0 0.0
      %1567 = vmatmul.mubr.f32.gmra.mxu0 %v1218
      %v1568 = vpop.f32.mrf.mxu0
      %v1569 = vadd.f32 %v1203, %v1568
      %v1570 = vpop.f32.mrf.mxu0
      %v1571 = vadd.f32 %v1203, %v1570
      %1572 = vmatprep.mubr.f32.mxu0 0.0
      %1573 = vmatmul.mubr.f32.gmra.mxu0 %v1221
      %v1574 = vpop.f32.mrf.mxu0
      %v1575 = vadd.f32 %v1208, %v1574
      %v1576 = vpop.f32.mrf.mxu0
      %v1577 = vadd.f32 %v1208, %v1576
      %1578 = vdwg.mxu0
      %v1579 = vmax.f32 %v1290, 0.0
      %v1580 = vmax.f32 %v1292, 0.0
      %v1581 = vmax.f32 %v1379, 0.0
      %v1582 = vmax.f32 %v1381, 0.0
      %v1583 = vmax.f32 %v1468, 0.0
      %v1584 = vmax.f32 %v1470, 0.0
      %v1585 = vmax.f32 %v1557, 0.0
      %v1586 = vmax.f32 %v1559, 0.0
      %v1587 = vmax.f32 %v1296, 0.0
      %v1588 = vmax.f32 %v1298, 0.0
      %v1589 = vmax.f32 %v1385, 0.0
      %v1590 = vmax.f32 %v1387, 0.0
      %v1591 = vmax.f32 %v1474, 0.0
      %v1592 = vmax.f32 %v1476, 0.0
      %v1593 = vmax.f32 %v1563, 0.0
      %v1594 = vmax.f32 %v1565, 0.0
      %v1595 = vmax.f32 %v1302, 0.0
      %v1596 = vmax.f32 %v1304, 0.0
      %v1597 = vmax.f32 %v1391, 0.0
      %v1598 = vmax.f32 %v1393, 0.0
      %v1599 = vmax.f32 %v1480, 0.0
      %v1600 = vmax.f32 %v1482, 0.0
      %v1601 = vmax.f32 %v1569, 0.0
      %v1602 = vmax.f32 %v1571, 0.0
      %v1603 = vmax.f32 %v1308, 0.0
      %v1604 = vmax.f32 %v1310, 0.0
      %v1605 = vmax.f32 %v1397, 0.0
      %v1606 = vmax.f32 %v1399, 0.0
      %v1607 = vmax.f32 %v1486, 0.0
      %v1608 = vmax.f32 %v1488, 0.0
      %v1609 = vmax.f32 %v1575, 0.0
      %v1610 = vmax.f32 %v1577, 0.0
      %s1611 = scalar_lea.vmem %s3, 32
      %v1612 = vld [vmem:[%s1611] sm:$0xff]
      %v1613 = vld [vmem:[%s1611 + $0x8] sm:$0xff]
      %v1614 = vld [vmem:[%s1611 + $0x10] sm:$0xff]
      %v1615 = vld [vmem:[%s1611 + $0x18] sm:$0xff]
      %s1616 = scalar_lea.vmem %s4, 32
      %v1617 = vld [vmem:[%s1616] sm:$0xff]
      %v1618 = vld [vmem:[%s1616 + $0x8] sm:$0xff]
      %v1619 = vld [vmem:[%s1616 + $0x10] sm:$0xff]
      %v1620 = vld [vmem:[%s1616 + $0x18] sm:$0xff]
      %1622 = vset.pattern.permute.xlu0 0
      %1623 = vperm.xlu0 %1622, %v1617
      %v1624 = vpop.permute.xlu0 %1623
      %1627 = vset.pattern.permute.xlu0 0
      %1628 = vperm.xlu0 %1627, %v1618
      %v1629 = vpop.permute.xlu0 %1628
      %1632 = vset.pattern.permute.xlu0 0
      %1633 = vperm.xlu0 %1632, %v1619
      %v1634 = vpop.permute.xlu0 %1633
      %1637 = vset.pattern.permute.xlu0 0
      %1638 = vperm.xlu0 %1637, %v1620
      %v1639 = vpop.permute.xlu0 %1638
      %v1642 = vsel %vm1210, %v1612, 0
      %v1645 = vsel %vm1210, %v1613, 0
      %v1648 = vsel %vm1210, %v1614, 0
      %v1651 = vsel %vm1210, %v1615, 0
      %1653 = vmatprep.subr.mxu0 0.0
      %1654 = vmatpush1.msra.mxu0 0.0
      %1655 = vmatprep.subr.mxu0 0.0
      %1656 = vmatpush1.msra.mxu0 0.0
      %1657 = vmatprep.subr.mxu0 0.0
      %1658 = vmatpush1.msra.mxu0 0.0
      %1659 = vmatprep.subr.mxu0 0.0
      %1660 = vmatpush1.msra.mxu0 0.0
      %1661 = vmatprep.subr.mxu0 0.0
      %1662 = vmatpush1.msra.mxu0 0.0
      %1663 = vmatprep.subr.mxu0 0.0
      %1664 = vmatpush1.msra.mxu0 0.0
      %1665 = vmatprep.subr.mxu0 0.0
      %1666 = vmatpush1.msra.mxu0 0.0
      %1667 = vmatprep.subr.mxu0 0.0
      %1668 = vmatpush1.msra.mxu0 0.0
      %1669 = vmatprep.subr.mxu0 0.0
      %1670 = vmatpush1.msra.mxu0 0.0
      %1671 = vmatprep.subr.mxu0 0.0
      %1672 = vmatpush1.msra.mxu0 0.0
      %1673 = vmatprep.subr.mxu0 0.0
      %1674 = vmatpush1.msra.mxu0 0.0
      %1675 = vmatprep.subr.mxu0 0.0
      %1676 = vmatpush1.msra.mxu0 0.0
      %1677 = vmatprep.subr.mxu0 %v1604
      %1678 = vmatpush1.msra.mxu0 %v1603
      %1679 = vmatprep.subr.mxu0 %v1596
      %1680 = vmatpush1.msra.mxu0 %v1595
      %1681 = vmatprep.subr.mxu0 %v1588
      %1682 = vmatpush1.msra.mxu0 %v1587
      %1683 = vmatprep.subr.mxu0 %v1580
      %1684 = vmatpush1.msra.mxu0 %v1579
      %1685 = vmatprep.subr.mxu0 0.0
      %1686 = vmatpush2.msra.mxu0 0.0
      %1687 = vmatprep.subr.mxu0 0.0
      %1688 = vmatpush2.msra.mxu0 0.0
      %1689 = vmatprep.subr.mxu0 0.0
      %1690 = vmatpush2.msra.mxu0 0.0
      %1691 = vmatprep.subr.mxu0 0.0
      %1692 = vmatpush2.msra.mxu0 0.0
      %1693 = vmatprep.subr.mxu0 0.0
      %1694 = vmatpush2.msra.mxu0 0.0
      %1695 = vmatprep.subr.mxu0 0.0
      %1696 = vmatpush2.msra.mxu0 0.0
      %1697 = vmatprep.subr.mxu0 0.0
      %1698 = vmatpush2.msra.mxu0 0.0
      %1699 = vmatprep.subr.mxu0 0.0
      %1700 = vmatpush2.msra.mxu0 0.0
      %1701 = vmatprep.subr.mxu0 0.0
      %1702 = vmatpush2.msra.mxu0 0.0
      %1703 = vmatprep.subr.mxu0 0.0
      %1704 = vmatpush2.msra.mxu0 0.0
      %1705 = vmatprep.subr.mxu0 0.0
      %1706 = vmatpush2.msra.mxu0 0.0
      %1707 = vmatprep.subr.mxu0 0.0
      %1708 = vmatpush2.msra.mxu0 0.0
      %1709 = vmatprep.subr.mxu0 0.0
      %1710 = vmatpush2.msra.mxu0 0.0
      %1711 = vmatprep.subr.mxu0 0.0
      %1712 = vmatpush2.msra.mxu0 0.0
      %1713 = vmatprep.subr.mxu0 0.0
      %1714 = vmatpush2.msra.mxu0 0.0
      %1715 = vmatprep.subr.mxu0 0.0
      %1716 = vmatpush2.msra.mxu0 0.0
      %1717 = vmatprep.mubr.f32.mxu0 0.0
      %1718 = vmatmul.mubr.f32.gmra.mxu0 %v1642
      %v1719 = vpop.f32.mrf.mxu0
      %v1720 = vadd.f32 %v1624, %v1719
      %v1721 = vpop.f32.mrf.mxu0
      %v1722 = vadd.f32 %v1624, %v1721
      %1723 = vmatprep.mubr.f32.mxu0 0.0
      %1724 = vmatmul.mubr.f32.gmra.mxu0 %v1645
      %v1725 = vpop.f32.mrf.mxu0
      %v1726 = vadd.f32 %v1629, %v1725
      %v1727 = vpop.f32.mrf.mxu0
      %v1728 = vadd.f32 %v1629, %v1727
      %1729 = vmatprep.mubr.f32.mxu0 0.0
      %1730 = vmatmul.mubr.f32.gmra.mxu0 %v1648
      %v1731 = vpop.f32.mrf.mxu0
      %v1732 = vadd.f32 %v1634, %v1731
      %v1733 = vpop.f32.mrf.mxu0
      %v1734 = vadd.f32 %v1634, %v1733
      %1735 = vmatprep.mubr.f32.mxu0 0.0
      %1736 = vmatmul.mubr.f32.gmra.mxu0 %v1651
      %v1737 = vpop.f32.mrf.mxu0
      %v1738 = vadd.f32 %v1639, %v1737
      %v1739 = vpop.f32.mrf.mxu0
      %v1740 = vadd.f32 %v1639, %v1739
      %1741 = vdwg.mxu0
      %1742 = vmatprep.subr.mxu0 0.0
      %1743 = vmatpush1.msra.mxu0 0.0
      %1744 = vmatprep.subr.mxu0 0.0
      %1745 = vmatpush1.msra.mxu0 0.0
      %1746 = vmatprep.subr.mxu0 0.0
      %1747 = vmatpush1.msra.mxu0 0.0
      %1748 = vmatprep.subr.mxu0 0.0
      %1749 = vmatpush1.msra.mxu0 0.0
      %1750 = vmatprep.subr.mxu0 0.0
      %1751 = vmatpush1.msra.mxu0 0.0
      %1752 = vmatprep.subr.mxu0 0.0
      %1753 = vmatpush1.msra.mxu0 0.0
      %1754 = vmatprep.subr.mxu0 0.0
      %1755 = vmatpush1.msra.mxu0 0.0
      %1756 = vmatprep.subr.mxu0 0.0
      %1757 = vmatpush1.msra.mxu0 0.0
      %1758 = vmatprep.subr.mxu0 0.0
      %1759 = vmatpush1.msra.mxu0 0.0
      %1760 = vmatprep.subr.mxu0 0.0
      %1761 = vmatpush1.msra.mxu0 0.0
      %1762 = vmatprep.subr.mxu0 0.0
      %1763 = vmatpush1.msra.mxu0 0.0
      %1764 = vmatprep.subr.mxu0 0.0
      %1765 = vmatpush1.msra.mxu0 0.0
      %1766 = vmatprep.subr.mxu0 %v1606
      %1767 = vmatpush1.msra.mxu0 %v1605
      %1768 = vmatprep.subr.mxu0 %v1598
      %1769 = vmatpush1.msra.mxu0 %v1597
      %1770 = vmatprep.subr.mxu0 %v1590
      %1771 = vmatpush1.msra.mxu0 %v1589
      %1772 = vmatprep.subr.mxu0 %v1582
      %1773 = vmatpush1.msra.mxu0 %v1581
      %1774 = vmatprep.subr.mxu0 0.0
      %1775 = vmatpush2.msra.mxu0 0.0
      %1776 = vmatprep.subr.mxu0 0.0
      %1777 = vmatpush2.msra.mxu0 0.0
      %1778 = vmatprep.subr.mxu0 0.0
      %1779 = vmatpush2.msra.mxu0 0.0
      %1780 = vmatprep.subr.mxu0 0.0
      %1781 = vmatpush2.msra.mxu0 0.0
      %1782 = vmatprep.subr.mxu0 0.0
      %1783 = vmatpush2.msra.mxu0 0.0
      %1784 = vmatprep.subr.mxu0 0.0
      %1785 = vmatpush2.msra.mxu0 0.0
      %1786 = vmatprep.subr.mxu0 0.0
      %1787 = vmatpush2.msra.mxu0 0.0
      %1788 = vmatprep.subr.mxu0 0.0
      %1789 = vmatpush2.msra.mxu0 0.0
      %1790 = vmatprep.subr.mxu0 0.0
      %1791 = vmatpush2.msra.mxu0 0.0
      %1792 = vmatprep.subr.mxu0 0.0
      %1793 = vmatpush2.msra.mxu0 0.0
      %1794 = vmatprep.subr.mxu0 0.0
      %1795 = vmatpush2.msra.mxu0 0.0
      %1796 = vmatprep.subr.mxu0 0.0
      %1797 = vmatpush2.msra.mxu0 0.0
      %1798 = vmatprep.subr.mxu0 0.0
      %1799 = vmatpush2.msra.mxu0 0.0
      %1800 = vmatprep.subr.mxu0 0.0
      %1801 = vmatpush2.msra.mxu0 0.0
      %1802 = vmatprep.subr.mxu0 0.0
      %1803 = vmatpush2.msra.mxu0 0.0
      %1804 = vmatprep.subr.mxu0 0.0
      %1805 = vmatpush2.msra.mxu0 0.0
      %1806 = vmatprep.mubr.f32.mxu0 0.0
      %1807 = vmatmul.mubr.f32.gmra.mxu0 %v1642
      %v1808 = vpop.f32.mrf.mxu0
      %v1809 = vadd.f32 %v1624, %v1808
      %v1810 = vpop.f32.mrf.mxu0
      %v1811 = vadd.f32 %v1624, %v1810
      %1812 = vmatprep.mubr.f32.mxu0 0.0
      %1813 = vmatmul.mubr.f32.gmra.mxu0 %v1645
      %v1814 = vpop.f32.mrf.mxu0
      %v1815 = vadd.f32 %v1629, %v1814
      %v1816 = vpop.f32.mrf.mxu0
      %v1817 = vadd.f32 %v1629, %v1816
      %1818 = vmatprep.mubr.f32.mxu0 0.0
      %1819 = vmatmul.mubr.f32.gmra.mxu0 %v1648
      %v1820 = vpop.f32.mrf.mxu0
      %v1821 = vadd.f32 %v1634, %v1820
      %v1822 = vpop.f32.mrf.mxu0
      %v1823 = vadd.f32 %v1634, %v1822
      %1824 = vmatprep.mubr.f32.mxu0 0.0
      %1825 = vmatmul.mubr.f32.gmra.mxu0 %v1651
      %v1826 = vpop.f32.mrf.mxu0
      %v1827 = vadd.f32 %v1639, %v1826
      %v1828 = vpop.f32.mrf.mxu0
      %v1829 = vadd.f32 %v1639, %v1828
      %1830 = vdwg.mxu0
      %1831 = vmatprep.subr.mxu0 0.0
      %1832 = vmatpush1.msra.mxu0 0.0
      %1833 = vmatprep.subr.mxu0 0.0
      %1834 = vmatpush1.msra.mxu0 0.0
      %1835 = vmatprep.subr.mxu0 0.0
      %1836 = vmatpush1.msra.mxu0 0.0
      %1837 = vmatprep.subr.mxu0 0.0
      %1838 = vmatpush1.msra.mxu0 0.0
      %1839 = vmatprep.subr.mxu0 0.0
      %1840 = vmatpush1.msra.mxu0 0.0
      %1841 = vmatprep.subr.mxu0 0.0
      %1842 = vmatpush1.msra.mxu0 0.0
      %1843 = vmatprep.subr.mxu0 0.0
      %1844 = vmatpush1.msra.mxu0 0.0
      %1845 = vmatprep.subr.mxu0 0.0
      %1846 = vmatpush1.msra.mxu0 0.0
      %1847 = vmatprep.subr.mxu0 0.0
      %1848 = vmatpush1.msra.mxu0 0.0
      %1849 = vmatprep.subr.mxu0 0.0
      %1850 = vmatpush1.msra.mxu0 0.0
      %1851 = vmatprep.subr.mxu0 0.0
      %1852 = vmatpush1.msra.mxu0 0.0
      %1853 = vmatprep.subr.mxu0 0.0
      %1854 = vmatpush1.msra.mxu0 0.0
      %1855 = vmatprep.subr.mxu0 %v1608
      %1856 = vmatpush1.msra.mxu0 %v1607
      %1857 = vmatprep.subr.mxu0 %v1600
      %1858 = vmatpush1.msra.mxu0 %v1599
      %1859 = vmatprep.subr.mxu0 %v1592
      %1860 = vmatpush1.msra.mxu0 %v1591
      %1861 = vmatprep.subr.mxu0 %v1584
      %1862 = vmatpush1.msra.mxu0 %v1583
      %1863 = vmatprep.subr.mxu0 0.0
      %1864 = vmatpush2.msra.mxu0 0.0
      %1865 = vmatprep.subr.mxu0 0.0
      %1866 = vmatpush2.msra.mxu0 0.0
      %1867 = vmatprep.subr.mxu0 0.0
      %1868 = vmatpush2.msra.mxu0 0.0
      %1869 = vmatprep.subr.mxu0 0.0
      %1870 = vmatpush2.msra.mxu0 0.0
      %1871 = vmatprep.subr.mxu0 0.0
      %1872 = vmatpush2.msra.mxu0 0.0
      %1873 = vmatprep.subr.mxu0 0.0
      %1874 = vmatpush2.msra.mxu0 0.0
      %1875 = vmatprep.subr.mxu0 0.0
      %1876 = vmatpush2.msra.mxu0 0.0
      %1877 = vmatprep.subr.mxu0 0.0
      %1878 = vmatpush2.msra.mxu0 0.0
      %1879 = vmatprep.subr.mxu0 0.0
      %1880 = vmatpush2.msra.mxu0 0.0
      %1881 = vmatprep.subr.mxu0 0.0
      %1882 = vmatpush2.msra.mxu0 0.0
      %1883 = vmatprep.subr.mxu0 0.0
      %1884 = vmatpush2.msra.mxu0 0.0
      %1885 = vmatprep.subr.mxu0 0.0
      %1886 = vmatpush2.msra.mxu0 0.0
      %1887 = vmatprep.subr.mxu0 0.0
      %1888 = vmatpush2.msra.mxu0 0.0
      %1889 = vmatprep.subr.mxu0 0.0
      %1890 = vmatpush2.msra.mxu0 0.0
      %1891 = vmatprep.subr.mxu0 0.0
      %1892 = vmatpush2.msra.mxu0 0.0
      %1893 = vmatprep.subr.mxu0 0.0
      %1894 = vmatpush2.msra.mxu0 0.0
      %1895 = vmatprep.mubr.f32.mxu0 0.0
      %1896 = vmatmul.mubr.f32.gmra.mxu0 %v1642
      %v1897 = vpop.f32.mrf.mxu0
      %v1898 = vadd.f32 %v1624, %v1897
      %v1899 = vpop.f32.mrf.mxu0
      %v1900 = vadd.f32 %v1624, %v1899
      %1901 = vmatprep.mubr.f32.mxu0 0.0
      %1902 = vmatmul.mubr.f32.gmra.mxu0 %v1645
      %v1903 = vpop.f32.mrf.mxu0
      %v1904 = vadd.f32 %v1629, %v1903
      %v1905 = vpop.f32.mrf.mxu0
      %v1906 = vadd.f32 %v1629, %v1905
      %1907 = vmatprep.mubr.f32.mxu0 0.0
      %1908 = vmatmul.mubr.f32.gmra.mxu0 %v1648
      %v1909 = vpop.f32.mrf.mxu0
      %v1910 = vadd.f32 %v1634, %v1909
      %v1911 = vpop.f32.mrf.mxu0
      %v1912 = vadd.f32 %v1634, %v1911
      %1913 = vmatprep.mubr.f32.mxu0 0.0
      %1914 = vmatmul.mubr.f32.gmra.mxu0 %v1651
      %v1915 = vpop.f32.mrf.mxu0
      %v1916 = vadd.f32 %v1639, %v1915
      %v1917 = vpop.f32.mrf.mxu0
      %v1918 = vadd.f32 %v1639, %v1917
      %1919 = vdwg.mxu0
      %1920 = vmatprep.subr.mxu0 0.0
      %1921 = vmatpush1.msra.mxu0 0.0
      %1922 = vmatprep.subr.mxu0 0.0
      %1923 = vmatpush1.msra.mxu0 0.0
      %1924 = vmatprep.subr.mxu0 0.0
      %1925 = vmatpush1.msra.mxu0 0.0
      %1926 = vmatprep.subr.mxu0 0.0
      %1927 = vmatpush1.msra.mxu0 0.0
      %1928 = vmatprep.subr.mxu0 0.0
      %1929 = vmatpush1.msra.mxu0 0.0
      %1930 = vmatprep.subr.mxu0 0.0
      %1931 = vmatpush1.msra.mxu0 0.0
      %1932 = vmatprep.subr.mxu0 0.0
      %1933 = vmatpush1.msra.mxu0 0.0
      %1934 = vmatprep.subr.mxu0 0.0
      %1935 = vmatpush1.msra.mxu0 0.0
      %1936 = vmatprep.subr.mxu0 0.0
      %1937 = vmatpush1.msra.mxu0 0.0
      %1938 = vmatprep.subr.mxu0 0.0
      %1939 = vmatpush1.msra.mxu0 0.0
      %1940 = vmatprep.subr.mxu0 0.0
      %1941 = vmatpush1.msra.mxu0 0.0
      %1942 = vmatprep.subr.mxu0 0.0
      %1943 = vmatpush1.msra.mxu0 0.0
      %1944 = vmatprep.subr.mxu0 %v1610
      %1945 = vmatpush1.msra.mxu0 %v1609
      %1946 = vmatprep.subr.mxu0 %v1602
      %1947 = vmatpush1.msra.mxu0 %v1601
      %1948 = vmatprep.subr.mxu0 %v1594
      %1949 = vmatpush1.msra.mxu0 %v1593
      %1950 = vmatprep.subr.mxu0 %v1586
      %1951 = vmatpush1.msra.mxu0 %v1585
      %1952 = vmatprep.subr.mxu0 0.0
      %1953 = vmatpush2.msra.mxu0 0.0
      %1954 = vmatprep.subr.mxu0 0.0
      %1955 = vmatpush2.msra.mxu0 0.0
      %1956 = vmatprep.subr.mxu0 0.0
      %1957 = vmatpush2.msra.mxu0 0.0
      %1958 = vmatprep.subr.mxu0 0.0
      %1959 = vmatpush2.msra.mxu0 0.0
      %1960 = vmatprep.subr.mxu0 0.0
      %1961 = vmatpush2.msra.mxu0 0.0
      %1962 = vmatprep.subr.mxu0 0.0
      %1963 = vmatpush2.msra.mxu0 0.0
      %1964 = vmatprep.subr.mxu0 0.0
      %1965 = vmatpush2.msra.mxu0 0.0
      %1966 = vmatprep.subr.mxu0 0.0
      %1967 = vmatpush2.msra.mxu0 0.0
      %1968 = vmatprep.subr.mxu0 0.0
      %1969 = vmatpush2.msra.mxu0 0.0
      %1970 = vmatprep.subr.mxu0 0.0
      %1971 = vmatpush2.msra.mxu0 0.0
      %1972 = vmatprep.subr.mxu0 0.0
      %1973 = vmatpush2.msra.mxu0 0.0
      %1974 = vmatprep.subr.mxu0 0.0
      %1975 = vmatpush2.msra.mxu0 0.0
      %1976 = vmatprep.subr.mxu0 0.0
      %1977 = vmatpush2.msra.mxu0 0.0
      %1978 = vmatprep.subr.mxu0 0.0
      %1979 = vmatpush2.msra.mxu0 0.0
      %1980 = vmatprep.subr.mxu0 0.0
      %1981 = vmatpush2.msra.mxu0 0.0
      %1982 = vmatprep.subr.mxu0 0.0
      %1983 = vmatpush2.msra.mxu0 0.0
      %1984 = vmatprep.mubr.f32.mxu0 0.0
      %1985 = vmatmul.mubr.f32.gmra.mxu0 %v1642
      %v1986 = vpop.f32.mrf.mxu0
      %v1987 = vadd.f32 %v1624, %v1986
      %v1988 = vpop.f32.mrf.mxu0
      %v1989 = vadd.f32 %v1624, %v1988
      %1990 = vmatprep.mubr.f32.mxu0 0.0
      %1991 = vmatmul.mubr.f32.gmra.mxu0 %v1645
      %v1992 = vpop.f32.mrf.mxu0
      %v1993 = vadd.f32 %v1629, %v1992
      %v1994 = vpop.f32.mrf.mxu0
      %v1995 = vadd.f32 %v1629, %v1994
      %1996 = vmatprep.mubr.f32.mxu0 0.0
      %1997 = vmatmul.mubr.f32.gmra.mxu0 %v1648
      %v1998 = vpop.f32.mrf.mxu0
      %v1999 = vadd.f32 %v1634, %v1998
      %v2000 = vpop.f32.mrf.mxu0
      %v2001 = vadd.f32 %v1634, %v2000
      %2002 = vmatprep.mubr.f32.mxu0 0.0
      %2003 = vmatmul.mubr.f32.gmra.mxu0 %v1651
      %v2004 = vpop.f32.mrf.mxu0
      %v2005 = vadd.f32 %v1639, %v2004
      %v2006 = vpop.f32.mrf.mxu0
      %v2007 = vadd.f32 %v1639, %v2006
      %2008 = vdwg.mxu0
      %v2009 = vld [vmem:[#allocation3] sm:$0xff]
      %v2010 = vld [vmem:[#allocation3 + $0x8] sm:$0xff]
      %v2011 = vld [vmem:[#allocation3 + $0x10] sm:$0xff]
      %v2012 = vld [vmem:[#allocation3 + $0x18] sm:$0xff]
      %v2013 = vld [vmem:[#allocation3 + $0x20] sm:$0xff]
      %v2014 = vld [vmem:[#allocation3 + $0x28] sm:$0xff]
      %v2015 = vld [vmem:[#allocation3 + $0x30] sm:$0xff]
      %v2016 = vld [vmem:[#allocation3 + $0x38] sm:$0xff]
      %v2017 = vld [vmem:[#allocation3 + $0x40] sm:$0xff]
      %v2018 = vld [vmem:[#allocation3 + $0x48] sm:$0xff]
      %v2019 = vld [vmem:[#allocation3 + $0x50] sm:$0xff]
      %v2020 = vld [vmem:[#allocation3 + $0x58] sm:$0xff]
      %v2021 = vld [vmem:[#allocation3 + $0x60] sm:$0xff]
      %v2022 = vld [vmem:[#allocation3 + $0x68] sm:$0xff]
      %v2023 = vld [vmem:[#allocation3 + $0x70] sm:$0xff]
      %v2024 = vld [vmem:[#allocation3 + $0x78] sm:$0xff]
      %v2025 = vld [vmem:[#allocation3 + $0x80] sm:$0xff]
      %v2026 = vld [vmem:[#allocation3 + $0x88] sm:$0xff]
      %v2027 = vld [vmem:[#allocation3 + $0x90] sm:$0xff]
      %v2028 = vld [vmem:[#allocation3 + $0x98] sm:$0xff]
      %v2029 = vld [vmem:[#allocation3 + $0xa0] sm:$0xff]
      %v2030 = vld [vmem:[#allocation3 + $0xa8] sm:$0xff]
      %v2031 = vld [vmem:[#allocation3 + $0xb0] sm:$0xff]
      %v2032 = vld [vmem:[#allocation3 + $0xb8] sm:$0xff]
      %v2033 = vld [vmem:[#allocation3 + $0xc0] sm:$0xff]
      %v2034 = vld [vmem:[#allocation3 + $0xc8] sm:$0xff]
      %v2035 = vld [vmem:[#allocation3 + $0xd0] sm:$0xff]
      %v2036 = vld [vmem:[#allocation3 + $0xd8] sm:$0xff]
      %v2037 = vld [vmem:[#allocation3 + $0xe0] sm:$0xff]
      %v2038 = vld [vmem:[#allocation3 + $0xe8] sm:$0xff]
      %v2039 = vld [vmem:[#allocation3 + $0xf0] sm:$0xff]
      %v2040 = vld [vmem:[#allocation3 + $0xf8] sm:$0xff]
      %v2041 = vmul.f32 %v1720, %v2009
      %v2042 = vmul.f32 %v1722, %v2010
      %v2043 = vmul.f32 %v1809, %v2011
      %v2044 = vmul.f32 %v1811, %v2012
      %v2045 = vmul.f32 %v1898, %v2013
      %v2046 = vmul.f32 %v1900, %v2014
      %v2047 = vmul.f32 %v1987, %v2015
      %v2048 = vmul.f32 %v1989, %v2016
      %v2049 = vmul.f32 %v1726, %v2017
      %v2050 = vmul.f32 %v1728, %v2018
      %v2051 = vmul.f32 %v1815, %v2019
      %v2052 = vmul.f32 %v1817, %v2020
      %v2053 = vmul.f32 %v1904, %v2021
      %v2054 = vmul.f32 %v1906, %v2022
      %v2055 = vmul.f32 %v1993, %v2023
      %v2056 = vmul.f32 %v1995, %v2024
      %v2057 = vmul.f32 %v1732, %v2025
      %v2058 = vmul.f32 %v1734, %v2026
      %v2059 = vmul.f32 %v1821, %v2027
      %v2060 = vmul.f32 %v1823, %v2028
      %v2061 = vmul.f32 %v1910, %v2029
      %v2062 = vmul.f32 %v1912, %v2030
      %v2063 = vmul.f32 %v1999, %v2031
      %v2064 = vmul.f32 %v2001, %v2032
      %v2065 = vmul.f32 %v1738, %v2033
      %v2066 = vmul.f32 %v1740, %v2034
      %v2067 = vmul.f32 %v1827, %v2035
      %v2068 = vmul.f32 %v1829, %v2036
      %v2069 = vmul.f32 %v1916, %v2037
      %v2070 = vmul.f32 %v1918, %v2038
      %v2071 = vmul.f32 %v2005, %v2039
      %v2072 = vmul.f32 %v2007, %v2040
      %v2073 = vld [vmem:[%s5] sm:$0x7]
      %v2074 = vld [vmem:[%s6] sm:$0x7]
      %2076 = vset.pattern.permute.xlu0 0
      %2077 = vperm.xlu0 %2076, %v2074
      %v2078 = vpop.permute.xlu0 %2077
      %v2081 = vsel %vm1210, %v2073, 0
      %2083 = vmatprep.subr.mxu0 0.0
      %2084 = vmatpush1.msra.mxu0 0.0
      %2085 = vmatprep.subr.mxu0 0.0
      %2086 = vmatpush1.msra.mxu0 0.0
      %2087 = vmatprep.subr.mxu0 0.0
      %2088 = vmatpush1.msra.mxu0 0.0
      %2089 = vmatprep.subr.mxu0 0.0
      %2090 = vmatpush1.msra.mxu0 0.0
      %2091 = vmatprep.subr.mxu0 0.0
      %2092 = vmatpush1.msra.mxu0 0.0
      %2093 = vmatprep.subr.mxu0 0.0
      %2094 = vmatpush1.msra.mxu0 0.0
      %2095 = vmatprep.subr.mxu0 0.0
      %2096 = vmatpush1.msra.mxu0 0.0
      %2097 = vmatprep.subr.mxu0 0.0
      %2098 = vmatpush1.msra.mxu0 0.0
      %2099 = vmatprep.subr.mxu0 0.0
      %2100 = vmatpush1.msra.mxu0 0.0
      %2101 = vmatprep.subr.mxu0 0.0
      %2102 = vmatpush1.msra.mxu0 0.0
      %2103 = vmatprep.subr.mxu0 0.0
      %2104 = vmatpush1.msra.mxu0 0.0
      %2105 = vmatprep.subr.mxu0 0.0
      %2106 = vmatpush1.msra.mxu0 0.0
      %2107 = vmatprep.subr.mxu0 %v2066
      %2108 = vmatpush1.msra.mxu0 %v2065
      %2109 = vmatprep.subr.mxu0 %v2058
      %2110 = vmatpush1.msra.mxu0 %v2057
      %2111 = vmatprep.subr.mxu0 %v2050
      %2112 = vmatpush1.msra.mxu0 %v2049
      %2113 = vmatprep.subr.mxu0 %v2042
      %2114 = vmatpush1.msra.mxu0 %v2041
      %2115 = vmatprep.subr.mxu0 0.0
      %2116 = vmatpush2.msra.mxu0 0.0
      %2117 = vmatprep.subr.mxu0 0.0
      %2118 = vmatpush2.msra.mxu0 0.0
      %2119 = vmatprep.subr.mxu0 0.0
      %2120 = vmatpush2.msra.mxu0 0.0
      %2121 = vmatprep.subr.mxu0 0.0
      %2122 = vmatpush2.msra.mxu0 0.0
      %2123 = vmatprep.subr.mxu0 0.0
      %2124 = vmatpush2.msra.mxu0 0.0
      %2125 = vmatprep.subr.mxu0 0.0
      %2126 = vmatpush2.msra.mxu0 0.0
      %2127 = vmatprep.subr.mxu0 0.0
      %2128 = vmatpush2.msra.mxu0 0.0
      %2129 = vmatprep.subr.mxu0 0.0
      %2130 = vmatpush2.msra.mxu0 0.0
      %2131 = vmatprep.subr.mxu0 0.0
      %2132 = vmatpush2.msra.mxu0 0.0
      %2133 = vmatprep.subr.mxu0 0.0
      %2134 = vmatpush2.msra.mxu0 0.0
      %2135 = vmatprep.subr.mxu0 0.0
      %2136 = vmatpush2.msra.mxu0 0.0
      %2137 = vmatprep.subr.mxu0 0.0
      %2138 = vmatpush2.msra.mxu0 0.0
      %2139 = vmatprep.subr.mxu0 0.0
      %2140 = vmatpush2.msra.mxu0 0.0
      %2141 = vmatprep.subr.mxu0 0.0
      %2142 = vmatpush2.msra.mxu0 0.0
      %2143 = vmatprep.subr.mxu0 0.0
      %2144 = vmatpush2.msra.mxu0 0.0
      %2145 = vmatprep.subr.mxu0 0.0
      %2146 = vmatpush2.msra.mxu0 0.0
      %2147 = vmatprep.mubr.f32.mxu0 0.0
      %2148 = vmatmul.mubr.f32.gmra.mxu0 %v2081
      %v2149 = vpop.f32.mrf.mxu0
      %v2150 = vadd.f32 %v2078, %v2149
      %v2151 = vpop.f32.mrf.mxu0
      %v2152 = vadd.f32 %v2078, %v2151
      %2153 = vdwg.mxu0
      %2154 = vmatprep.subr.mxu0 0.0
      %2155 = vmatpush1.msra.mxu0 0.0
      %2156 = vmatprep.subr.mxu0 0.0
      %2157 = vmatpush1.msra.mxu0 0.0
      %2158 = vmatprep.subr.mxu0 0.0
      %2159 = vmatpush1.msra.mxu0 0.0
      %2160 = vmatprep.subr.mxu0 0.0
      %2161 = vmatpush1.msra.mxu0 0.0
      %2162 = vmatprep.subr.mxu0 0.0
      %2163 = vmatpush1.msra.mxu0 0.0
      %2164 = vmatprep.subr.mxu0 0.0
      %2165 = vmatpush1.msra.mxu0 0.0
      %2166 = vmatprep.subr.mxu0 0.0
      %2167 = vmatpush1.msra.mxu0 0.0
      %2168 = vmatprep.subr.mxu0 0.0
      %2169 = vmatpush1.msra.mxu0 0.0
      %2170 = vmatprep.subr.mxu0 0.0
      %2171 = vmatpush1.msra.mxu0 0.0
      %2172 = vmatprep.subr.mxu0 0.0
      %2173 = vmatpush1.msra.mxu0 0.0
      %2174 = vmatprep.subr.mxu0 0.0
      %2175 = vmatpush1.msra.mxu0 0.0
      %2176 = vmatprep.subr.mxu0 0.0
      %2177 = vmatpush1.msra.mxu0 0.0
      %2178 = vmatprep.subr.mxu0 %v2068
      %2179 = vmatpush1.msra.mxu0 %v2067
      %2180 = vmatprep.subr.mxu0 %v2060
      %2181 = vmatpush1.msra.mxu0 %v2059
      %2182 = vmatprep.subr.mxu0 %v2052
      %2183 = vmatpush1.msra.mxu0 %v2051
      %2184 = vmatprep.subr.mxu0 %v2044
      %2185 = vmatpush1.msra.mxu0 %v2043
      %2186 = vmatprep.subr.mxu0 0.0
      %2187 = vmatpush2.msra.mxu0 0.0
      %2188 = vmatprep.subr.mxu0 0.0
      %2189 = vmatpush2.msra.mxu0 0.0
      %2190 = vmatprep.subr.mxu0 0.0
      %2191 = vmatpush2.msra.mxu0 0.0
      %2192 = vmatprep.subr.mxu0 0.0
      %2193 = vmatpush2.msra.mxu0 0.0
      %2194 = vmatprep.subr.mxu0 0.0
      %2195 = vmatpush2.msra.mxu0 0.0
      %2196 = vmatprep.subr.mxu0 0.0
      %2197 = vmatpush2.msra.mxu0 0.0
      %2198 = vmatprep.subr.mxu0 0.0
      %2199 = vmatpush2.msra.mxu0 0.0
      %2200 = vmatprep.subr.mxu0 0.0
      %2201 = vmatpush2.msra.mxu0 0.0
      %2202 = vmatprep.subr.mxu0 0.0
      %2203 = vmatpush2.msra.mxu0 0.0
      %2204 = vmatprep.subr.mxu0 0.0
      %2205 = vmatpush2.msra.mxu0 0.0
      %2206 = vmatprep.subr.mxu0 0.0
      %2207 = vmatpush2.msra.mxu0 0.0
      %2208 = vmatprep.subr.mxu0 0.0
      %2209 = vmatpush2.msra.mxu0 0.0
      %2210 = vmatprep.subr.mxu0 0.0
      %2211 = vmatpush2.msra.mxu0 0.0
      %2212 = vmatprep.subr.mxu0 0.0
      %2213 = vmatpush2.msra.mxu0 0.0
      %2214 = vmatprep.subr.mxu0 0.0
      %2215 = vmatpush2.msra.mxu0 0.0
      %2216 = vmatprep.subr.mxu0 0.0
      %2217 = vmatpush2.msra.mxu0 0.0
      %2218 = vmatprep.mubr.f32.mxu0 0.0
      %2219 = vmatmul.mubr.f32.gmra.mxu0 %v2081
      %v2220 = vpop.f32.mrf.mxu0
      %v2221 = vadd.f32 %v2078, %v2220
      %v2222 = vpop.f32.mrf.mxu0
      %v2223 = vadd.f32 %v2078, %v2222
      %2224 = vdwg.mxu0
      %2225 = vmatprep.subr.mxu0 0.0
      %2226 = vmatpush1.msra.mxu0 0.0
      %2227 = vmatprep.subr.mxu0 0.0
      %2228 = vmatpush1.msra.mxu0 0.0
      %2229 = vmatprep.subr.mxu0 0.0
      %2230 = vmatpush1.msra.mxu0 0.0
      %2231 = vmatprep.subr.mxu0 0.0
      %2232 = vmatpush1.msra.mxu0 0.0
      %2233 = vmatprep.subr.mxu0 0.0
      %2234 = vmatpush1.msra.mxu0 0.0
      %2235 = vmatprep.subr.mxu0 0.0
      %2236 = vmatpush1.msra.mxu0 0.0
      %2237 = vmatprep.subr.mxu0 0.0
      %2238 = vmatpush1.msra.mxu0 0.0
      %2239 = vmatprep.subr.mxu0 0.0
      %2240 = vmatpush1.msra.mxu0 0.0
      %2241 = vmatprep.subr.mxu0 0.0
      %2242 = vmatpush1.msra.mxu0 0.0
      %2243 = vmatprep.subr.mxu0 0.0
      %2244 = vmatpush1.msra.mxu0 0.0
      %2245 = vmatprep.subr.mxu0 0.0
      %2246 = vmatpush1.msra.mxu0 0.0
      %2247 = vmatprep.subr.mxu0 0.0
      %2248 = vmatpush1.msra.mxu0 0.0
      %2249 = vmatprep.subr.mxu0 %v2070
      %2250 = vmatpush1.msra.mxu0 %v2069
      %2251 = vmatprep.subr.mxu0 %v2062
      %2252 = vmatpush1.msra.mxu0 %v2061
      %2253 = vmatprep.subr.mxu0 %v2054
      %2254 = vmatpush1.msra.mxu0 %v2053
      %2255 = vmatprep.subr.mxu0 %v2046
      %2256 = vmatpush1.msra.mxu0 %v2045
      %2257 = vmatprep.subr.mxu0 0.0
      %2258 = vmatpush2.msra.mxu0 0.0
      %2259 = vmatprep.subr.mxu0 0.0
      %2260 = vmatpush2.msra.mxu0 0.0
      %2261 = vmatprep.subr.mxu0 0.0
      %2262 = vmatpush2.msra.mxu0 0.0
      %2263 = vmatprep.subr.mxu0 0.0
      %2264 = vmatpush2.msra.mxu0 0.0
      %2265 = vmatprep.subr.mxu0 0.0
      %2266 = vmatpush2.msra.mxu0 0.0
      %2267 = vmatprep.subr.mxu0 0.0
      %2268 = vmatpush2.msra.mxu0 0.0
      %2269 = vmatprep.subr.mxu0 0.0
      %2270 = vmatpush2.msra.mxu0 0.0
      %2271 = vmatprep.subr.mxu0 0.0
      %2272 = vmatpush2.msra.mxu0 0.0
      %2273 = vmatprep.subr.mxu0 0.0
      %2274 = vmatpush2.msra.mxu0 0.0
      %2275 = vmatprep.subr.mxu0 0.0
      %2276 = vmatpush2.msra.mxu0 0.0
      %2277 = vmatprep.subr.mxu0 0.0
      %2278 = vmatpush2.msra.mxu0 0.0
      %2279 = vmatprep.subr.mxu0 0.0
      %2280 = vmatpush2.msra.mxu0 0.0
      %2281 = vmatprep.subr.mxu0 0.0
      %2282 = vmatpush2.msra.mxu0 0.0
      %2283 = vmatprep.subr.mxu0 0.0
      %2284 = vmatpush2.msra.mxu0 0.0
      %2285 = vmatprep.subr.mxu0 0.0
      %2286 = vmatpush2.msra.mxu0 0.0
      %2287 = vmatprep.subr.mxu0 0.0
      %2288 = vmatpush2.msra.mxu0 0.0
      %2289 = vmatprep.mubr.f32.mxu0 0.0
      %2290 = vmatmul.mubr.f32.gmra.mxu0 %v2081
      %v2291 = vpop.f32.mrf.mxu0
      %v2292 = vadd.f32 %v2078, %v2291
      %v2293 = vpop.f32.mrf.mxu0
      %v2294 = vadd.f32 %v2078, %v2293
      %2295 = vdwg.mxu0
      %2296 = vmatprep.subr.mxu0 0.0
      %2297 = vmatpush1.msra.mxu0 0.0
      %2298 = vmatprep.subr.mxu0 0.0
      %2299 = vmatpush1.msra.mxu0 0.0
      %2300 = vmatprep.subr.mxu0 0.0
      %2301 = vmatpush1.msra.mxu0 0.0
      %2302 = vmatprep.subr.mxu0 0.0
      %2303 = vmatpush1.msra.mxu0 0.0
      %2304 = vmatprep.subr.mxu0 0.0
      %2305 = vmatpush1.msra.mxu0 0.0
      %2306 = vmatprep.subr.mxu0 0.0
      %2307 = vmatpush1.msra.mxu0 0.0
      %2308 = vmatprep.subr.mxu0 0.0
      %2309 = vmatpush1.msra.mxu0 0.0
      %2310 = vmatprep.subr.mxu0 0.0
      %2311 = vmatpush1.msra.mxu0 0.0
      %2312 = vmatprep.subr.mxu0 0.0
      %2313 = vmatpush1.msra.mxu0 0.0
      %2314 = vmatprep.subr.mxu0 0.0
      %2315 = vmatpush1.msra.mxu0 0.0
      %2316 = vmatprep.subr.mxu0 0.0
      %2317 = vmatpush1.msra.mxu0 0.0
      %2318 = vmatprep.subr.mxu0 0.0
      %2319 = vmatpush1.msra.mxu0 0.0
      %2320 = vmatprep.subr.mxu0 %v2072
      %2321 = vmatpush1.msra.mxu0 %v2071
      %2322 = vmatprep.subr.mxu0 %v2064
      %2323 = vmatpush1.msra.mxu0 %v2063
      %2324 = vmatprep.subr.mxu0 %v2056
      %2325 = vmatpush1.msra.mxu0 %v2055
      %2326 = vmatprep.subr.mxu0 %v2048
      %2327 = vmatpush1.msra.mxu0 %v2047
      %2328 = vmatprep.subr.mxu0 0.0
      %2329 = vmatpush2.msra.mxu0 0.0
      %2330 = vmatprep.subr.mxu0 0.0
      %2331 = vmatpush2.msra.mxu0 0.0
      %2332 = vmatprep.subr.mxu0 0.0
      %2333 = vmatpush2.msra.mxu0 0.0
      %2334 = vmatprep.subr.mxu0 0.0
      %2335 = vmatpush2.msra.mxu0 0.0
      %2336 = vmatprep.subr.mxu0 0.0
      %2337 = vmatpush2.msra.mxu0 0.0
      %2338 = vmatprep.subr.mxu0 0.0
      %2339 = vmatpush2.msra.mxu0 0.0
      %2340 = vmatprep.subr.mxu0 0.0
      %2341 = vmatpush2.msra.mxu0 0.0
      %2342 = vmatprep.subr.mxu0 0.0
      %2343 = vmatpush2.msra.mxu0 0.0
      %2344 = vmatprep.subr.mxu0 0.0
      %2345 = vmatpush2.msra.mxu0 0.0
      %2346 = vmatprep.subr.mxu0 0.0
      %2347 = vmatpush2.msra.mxu0 0.0
      %2348 = vmatprep.subr.mxu0 0.0
      %2349 = vmatpush2.msra.mxu0 0.0
      %2350 = vmatprep.subr.mxu0 0.0
      %2351 = vmatpush2.msra.mxu0 0.0
      %2352 = vmatprep.subr.mxu0 0.0
      %2353 = vmatpush2.msra.mxu0 0.0
      %2354 = vmatprep.subr.mxu0 0.0
      %2355 = vmatpush2.msra.mxu0 0.0
      %2356 = vmatprep.subr.mxu0 0.0
      %2357 = vmatpush2.msra.mxu0 0.0
      %2358 = vmatprep.subr.mxu0 0.0
      %2359 = vmatpush2.msra.mxu0 0.0
      %2360 = vmatprep.mubr.f32.mxu0 0.0
      %2361 = vmatmul.mubr.f32.gmra.mxu0 %v2081
      %v2362 = vpop.f32.mrf.mxu0
      %v2363 = vadd.f32 %v2078, %v2362
      %v2364 = vpop.f32.mrf.mxu0
      %v2365 = vadd.f32 %v2078, %v2364
      %2366 = vdwg.mxu0
      %2367 = vst [vmem:[%s375] sm:$0x7] %v2150
      %s2368 = scalar_lea.vmem %s375, 4
      %2369 = vst [vmem:[%s2368] sm:$0x7] %v2152
      %s2370 = scalar_lea.vmem %s375, 8
      %2371 = vst [vmem:[%s2370] sm:$0x7] %v2221
      %s2372 = scalar_lea.vmem %s375, 12
      %2373 = vst [vmem:[%s2372] sm:$0x7] %v2223
      %s2374 = scalar_lea.vmem %s375, 16
      %2375 = vst [vmem:[%s2374] sm:$0x7] %v2292
      %s2376 = scalar_lea.vmem %s375, 20
      %2377 = vst [vmem:[%s2376] sm:$0x7] %v2294
      %s2378 = scalar_lea.vmem %s375, 24
      %2379 = vst [vmem:[%s2378] sm:$0x7] %v2363
      %s2380 = scalar_lea.vmem %s375, 28
      %2381 = vst [vmem:[%s2380] sm:$0x7] %v2365
      %s2382 = sadd.s32 %s26, %s27
      %s2383 = smul.u32 8, %s25
      %p2384 = scmp.lt.s32.totalorder %s24, 1
      %s2385 = scalar_select %p2384, %s24, 1
      %p2386 = scmp.lt.s32.totalorder %s2383, 7
      %s2387 = scalar_select %p2386, %s2383, 7
      %p2388 = scmp.lt.s32.totalorder %s2382, 0
      %s2389 = scalar_select %p2388, %s2382, 0
      %s2390 = sadd.s32 %s2389, %s2387
      %s2391 = smul.addr %s2385, 8
      %s2392 = sadd.s32 %s2390, %s2391
      %s2393 = smul.addr %s2392, 4
      %s2394 = scalar_lea.vmem %s7, %s2393
      // Predicated region
      $region53: #{tpu_custom_call.1} parent=47 // pred_check
        %p2395 = pneg %p231
      $region54: #{tpu_custom_call.1} parent=47 // pred_check_branch
        %2397 = sbr.rel (%p2395) target = $region56
      $region55: #{tpu_custom_call.1} parent=47 // pred_region
        %s2398 = sadd.s32 %s26, %s27
        %s2399 = smul.u32 8, %s25
      $region56: #{tpu_custom_call.1} parent=47 // pred_fallthru
        _
    $region48: #{tpu_custom_call.1} parent=5 // pred_fallthru
      _
    %p2400 = scmp.le.s32.totalorder 2, %s13
    // Predicated region
    $region57: #{tpu_custom_call.1} parent=5 // pred_check
      %p2401 = pneg %p2400
    $region58: #{tpu_custom_call.1} parent=5 // pred_check_branch
      %2403 = sbr.rel (%p2401) target = $region60
    $region59: #{tpu_custom_call.1} parent=5 // pred_region
      %s2404 = ssub.s32 %s13, 2
      // Predicated region
      $region61: #{tpu_custom_call.1} parent=59 // pred_check
        %p2405 = pneg %p237
      $region62: #{tpu_custom_call.1} parent=59 // pred_check_branch
        %2407 = sbr.rel (%p2405) target = $region64
      $region63: #{tpu_custom_call.1} parent=59 // pred_region
        %s2408 = sadd.s32 %s30, %s31
        %s2409 = smul.u32 8, %s29
        %p2410 = scmp.lt.s32.totalorder %s28, 1
        %s2411 = scalar_select %p2410, %s28, 1
        %p2412 = scmp.lt.s32.totalorder %s2409, 7
        %s2413 = scalar_select %p2412, %s2409, 7
        %p2414 = scmp.lt.s32.totalorder %s2408, 0
        %s2415 = scalar_select %p2414, %s2408, 0
        %s2416 = sadd.s32 %s2415, %s2413
        %s2417 = smul.addr %s2411, 8
        %s2418 = sadd.s32 %s2416, %s2417
        %s2419 = smul.addr %s2418, 4
        %s2420 = scalar_lea.vmem %s7, %s2419
      $region64: #{tpu_custom_call.1} parent=59 // pred_fallthru
        _
    $region60: #{tpu_custom_call.1} parent=5 // pred_fallthru
      _
  $region6: #{tpu_custom_call.1} parent=0 // loop_footer
    %s17 = sadd.s32 1, %s13
  $region7: #{tpu_custom_call.1} parent=0 // loop_footer_branch
    %12 = sbr.rel target = $region3
  $region8: #{tpu_custom_call.1} parent=0 // loop_exit
    _

</llo_original>
